<compile_context>
chip_gen: v7x
topology: tpu7x:2x2x1
jax: 0.10.0
libtpu: 0.0.40
codegen_flags: <defaults>
</compile_context>

<pallas_src>
import jax
import jax.numpy as jnp
import numpy as np
from jax import lax
from jax.experimental import pallas as pl
from jax.experimental.pallas import tpu as pltpu


_LANES = 128
_MAX_WIDEN = 16                     # cap on the row-widening factor r
_TM_MAX_CONV = 4096                 # widened rows per M-tile, conv layers
_TM_MAX_PROJ = 1024                 # smaller for fused conv4+proj (wide f32 acc)
_MIN_GRID_STEPS = 4                 # aim for >=4 M-tiles (megacore + pipelining)
_VMEM_LIMIT = 48 * 1024 * 1024      # <= ~48 MiB for v7x (64 MiB/TC); v5e/v6e
                                    # (128 MiB physical) could go higher.


# ----------------------------- Pallas kernels ------------------------------

def _matmul_shift_relu_kernel(x_ref, w_ref, shift_ref, o_ref):
    # x: (TM, Kw) bf16, w: (Kw, Nw) bf16 (BN scale pre-folded),
    # shift: (1, Nw) f32, o: (TM, Nw) bf16.
    acc = jnp.dot(x_ref[...], w_ref[...], preferred_element_type=jnp.float32)
    o_ref[...] = jnp.maximum(acc + shift_ref[...], 0.0).astype(o_ref.dtype)


def _matmul_shift_relu_proj_kernel(x_ref, w_ref, shift_ref, wp_ref, b_ref,
                                   o_ref):
    # Conv4 + BN + ReLU fused with the final 1x1 projection (+bias).
    h = jnp.dot(x_ref[...], w_ref[...], preferred_element_type=jnp.float32)
    h = jnp.maximum(h + shift_ref[...], 0.0)
    acc = jnp.dot(h.astype(wp_ref.dtype), wp_ref[...],
                  preferred_element_type=jnp.float32)
    o_ref[...] = (acc + b_ref[...]).astype(o_ref.dtype)


def _compiler_params():
    return pltpu.CompilerParams(
        dimension_semantics=("parallel",),   # M-tiles across both TCs on v7x
        vmem_limit_bytes=_VMEM_LIMIT,
    )


def matmul_shift_relu(x_w, w_w, shift_w, *, tm):
    mw, kw = x_w.shape
    nw = w_w.shape[1]
    return pl.pallas_call(
        _matmul_shift_relu_kernel,
        out_shape=jax.ShapeDtypeStruct((mw, nw), jnp.bfloat16),
        grid_spec=pltpu.PrefetchScalarGridSpec(
            num_scalar_prefetch=0,
            grid=(pl.cdiv(mw, tm),),              # ragged last block is masked
            in_specs=[
                pl.BlockSpec((tm, kw), lambda i: (i, 0)),   # streamed tiles
                pl.BlockSpec((kw, nw), lambda i: (0, 0)),   # resident weights
                pl.BlockSpec((1, nw), lambda i: (0, 0)),    # resident shift
            ],
            out_specs=pl.BlockSpec((tm, nw), lambda i: (i, 0)),
        ),
        compiler_params=_compiler_params(),
    )(x_w, w_w, shift_w)


def matmul_shift_relu_proj(x_w, w_w, shift_w, wp_w, b_w, *, tm,
                           out_dtype=jnp.bfloat16):
    mw, kw = x_w.shape
    nh = w_w.shape[1]
    nw = wp_w.shape[1]
    return pl.pallas_call(
        _matmul_shift_relu_proj_kernel,
        out_shape=jax.ShapeDtypeStruct((mw, nw), out_dtype),
        grid_spec=pltpu.PrefetchScalarGridSpec(
            num_scalar_prefetch=0,
            grid=(pl.cdiv(mw, tm),),
            in_specs=[
                pl.BlockSpec((tm, kw), lambda i: (i, 0)),   # streamed tiles
                pl.BlockSpec((kw, nh), lambda i: (0, 0)),   # resident conv w
                pl.BlockSpec((1, nh), lambda i: (0, 0)),    # resident shift
                pl.BlockSpec((nh, nw), lambda i: (0, 0)),   # resident proj w
                pl.BlockSpec((1, nw), lambda i: (0, 0)),    # resident bias
            ],
            out_specs=pl.BlockSpec((tm, nw), lambda i: (i, 0)),
        ),
        compiler_params=_compiler_params(),
    )(x_w, w_w, shift_w, wp_w, b_w)


# ------------------------------ JAX glue ops --------------------------------

def im2col_3x3_s2(x_nhwc):
    """3x3 kernel, stride 2, padding 1 patch extraction (NHWC, bf16)."""
    x_nhwc = x_nhwc.astype(jnp.bfloat16)
    B, H, W, C = x_nhwc.shape
    assert H % 2 == 0 and W % 2 == 0, "ConvStem expects even spatial dims"
    OH, OW = H // 2, W // 2
    xp = jnp.pad(x_nhwc, ((0, 0), (1, 1), (1, 1), (0, 0)))
    cols = []
    for kh in range(3):
        for kw in range(3):
            cols.append(xp[:, kh:kh + 2 * OH:2, kw:kw + 2 * OW:2, :])
    patches = jnp.concatenate(cols, axis=-1)          # (B, OH, OW, 9*C)
    return patches.reshape(B * OH * OW, 9 * C), (B, OH, OW)


def _widen_factor(m, cout):
    """Rows packed per widened row so stores are lane-dense (>=128 lanes).

    Falls back toward r=1 when divisibility fails (perf cliff, not a
    correctness issue); also keeps the widened row count a multiple of 8 so
    M-tiles are sublane-aligned.
    """
    r = max(1, min(_MAX_WIDEN, _LANES // cout))
    while r > 1 and (m % r != 0 or (m // r) % 8 != 0):
        r //= 2
    return r


def _block_diag(w2d, r):
    """(K, N) -> (r*K, r*N) with w2d repeated on the block diagonal."""
    if r == 1:
        return w2d
    k, n = w2d.shape
    eye = jnp.eye(r, dtype=w2d.dtype)
    return jnp.einsum("ab,kn->akbn", eye, w2d).reshape(r * k, r * n)


def _choose_tile(mw, tm_max):
    """Pick an M-tile: multiple of 8, <= tm_max, >= _MIN_GRID_STEPS tiles
    when possible.  If mw is not sublane-aligned, use one exact full block
    (block shape == array shape is always legal)."""
    if mw % 8 != 0:
        return mw
    tm = -(-mw // _MIN_GRID_STEPS)          # cdiv
    tm = ((tm + 7) // 8) * 8                # round up to a sublane multiple
    return max(8, min(tm, tm_max, mw))


def prepare_params(layers, w_proj, b_proj, *, batch, img_size):
    """Precompute widened block-diagonal weights / tiled shifts once.

    Returns (params, meta): `params` is a pytree of arrays (traced), `meta`
    is a hashable tuple of static ints used for reshapes / tiling.
    """
    H = W = img_size
    prepped, meta = [], []
    for p in layers:
        cin, cout = p["w_folded"].shape[2], p["w_folded"].shape[3]
        OH, OW = H // 2, W // 2
        M = batch * OH * OW
        r = _widen_factor(M, cout)
        K = 9 * cin
        w2d = p["w_folded"].reshape(K, cout).astype(jnp.bfloat16)
        w_w = _block_diag(w2d, r)
        shift_w = jnp.tile(p["shift"].reshape(1, cout).astype(jnp.float32),
                           (1, r))
        prepped.append((w_w, shift_w))
        meta.append((cin, cout, OH, OW, r))
        H, W = OH, OW
    E = w_proj.shape[1]
    r_last = meta[-1][4]
    wp_w = _block_diag(w_proj.astype(jnp.bfloat16), r_last)
    b_w = jnp.tile(b_proj.reshape(1, E).astype(jnp.float32), (1, r_last))
    prepped[-1] = prepped[-1] + (wp_w, b_w)
    return tuple(prepped), tuple(meta)


def conv_stem_forward(x_nchw, params, meta):
    """ConvStem.forward: 4x(conv3x3 s2 + BN + ReLU) -> conv1x1(+bias) -> flatten."""
    B, C, H, W = x_nchw.shape
    assert C == meta[0][0] and (H, W) == (2 * meta[0][2], 2 * meta[0][3]), (
        "input shape does not match prepared params")
    x = jnp.transpose(x_nchw, (0, 2, 3, 1))          # NCHW -> NHWC, once
    n = len(params)
    for li in range(n):
        cin, cout, OH, OW, r = meta[li]
        cols, _ = im2col_3x3_s2(x)                   # (M, 9*cin) bf16
        M = cols.shape[0]
        assert M % r == 0, "batch/spatial product incompatible with widen r"
        x_w = cols.reshape(M // r, r * 9 * cin)      # free, contiguous reshape
        mw = M // r
        if li < n - 1:
            w_w, shift_w = params[li]
            tm = _choose_tile(mw, _TM_MAX_CONV)
            out_w = matmul_shift_relu(x_w, w_w, shift_w, tm=tm)
            x = out_w.reshape(M, cout).reshape(B, OH, OW, cout)   # bf16
        else:
            w_w, shift_w, wp_w, b_w = params[li]
            E = wp_w.shape[1] // r
            tm = _choose_tile(mw, _TM_MAX_PROJ)
            out_w = matmul_shift_relu_proj(x_w, w_w, shift_w, wp_w, b_w, tm=tm)
            # Rows are ordered (b, oh, ow) row-major -> equivalent to NCHW
            # `flatten(2).transpose(1, 2)`.  self.norm is nn.Identity().
            return out_w.reshape(M, E).reshape(B, OH * OW, E)


def init_params(key, embed_dim=64, eps=1e-5):
    """Deterministic synthetic params matching the ConvStem module shapes.

    BN (eval mode) is folded: scale = gamma/sqrt(var+eps) is multiplied into
    the conv weight (bf16, the MXU input dtype); shift = beta - mean*scale is
    an f32 per-channel vector added in-kernel.
    """
    dims = [3]
    d = embed_dim // 8
    for _ in range(4):
        dims.append(d)
        d *= 2
    layers = []
    for l in range(4):
        cin, cout = dims[l], dims[l + 1]
        key, k1, k2, k3, k4, k5 = jax.random.split(key, 6)
        # weight stored HWIO -> reshape(9*cin, cout) matches im2col ordering
        w = jax.random.normal(k1, (3, 3, cin, cout), jnp.float32) / np.sqrt(9 * cin)
        gamma = 1.0 + 0.1 * jax.random.normal(k2, (cout,), jnp.float32)
        beta = 0.1 * jax.random.normal(k3, (cout,), jnp.float32)
        mean = 0.1 * jax.random.normal(k4, (cout,), jnp.float32)
        var = jax.random.uniform(k5, (cout,), jnp.float32, 0.5, 1.5)
        scale = gamma / jnp.sqrt(var + eps)
        shift = beta - mean * scale
        layers.append(dict(w_folded=(w * scale).astype(jnp.bfloat16),
                           shift=shift.astype(jnp.float32)))
    key, k1, k2 = jax.random.split(key, 3)
    cin = dims[-1]
    w_proj = (jax.random.normal(k1, (cin, embed_dim), jnp.float32)
              / np.sqrt(cin)).astype(jnp.bfloat16)
    b_proj = 0.1 * jax.random.normal(k2, (embed_dim,), jnp.float32)
    return layers, w_proj, b_proj


def reference_forward(x_nchw, layers, w_proj, b_proj):
    """Pure-JAX reference (lax conv, f32 math, bf16 inter-layer storage to
    mirror the kernel's activation dtype; remaining diff is accumulation
    order plus the final bf16 store rounding)."""
    x = jnp.transpose(x_nchw, (0, 2, 3, 1))
    x = x.astype(jnp.bfloat16).astype(jnp.float32)
    for p in layers:
        w = p["w_folded"].astype(jnp.float32)
        y = lax.conv_general_dilated(
            x, w, window_strides=(2, 2), padding=((1, 1), (1, 1)),
            dimension_numbers=("NHWC", "HWIO", "NHWC"))
        x = jnp.maximum(y + p["shift"].reshape(1, 1, 1, -1), 0.0)
        x = x.astype(jnp.bfloat16).astype(jnp.float32)
    y = (jnp.einsum("bhwc,cd->bhwd", x, w_proj.astype(jnp.float32))
         + b_proj.reshape(1, 1, 1, -1))
    B, H, W, E = y.shape
    return y.reshape(B, H * W, E)


if __name__ == "__main__":
    key = jax.random.PRNGKey(0)
    k_in, k_p = jax.random.split(key)

    # Small shapes consistent with the module: in_chans is hard-coded to 3 in
    # the stem; 4 stride-2 convs => spatial / 16, so img_size=32 -> 2x2 grid.
    B, in_chans, img_size, embed_dim = 2, 3, 32, 64

    x = jax.random.normal(k_in, (B, in_chans, img_size, img_size), jnp.float32)
    # Round input to bf16 precision once so the kernel (bf16 storage) and the
    # reference consume identical values.
    x = x.astype(jnp.bfloat16).astype(jnp.float32)

    layers, w_proj, b_proj = init_params(k_p, embed_dim=embed_dim)
    params, meta = prepare_params(layers, w_proj, b_proj,
                                  batch=B, img_size=img_size)

    fwd = jax.jit(conv_stem_forward, static_argnums=2)
    out = jax.block_until_ready(fwd(x, params, meta))

    num_patches = (img_size // 16) ** 2
    assert out.shape == (B, num_patches, embed_dim), out.shape
    assert out.dtype == jnp.bfloat16

    ref = reference_forward(x, layers, w_proj, b_proj)
    np.testing.assert_allclose(np.asarray(out.astype(jnp.float32)),
                               np.asarray(ref), rtol=3e-2, atol=3e-2)
    print("KERNEL_OK")
</pallas_src>

<mosaic_0001>
module attributes {stable_mosaic.version = 11 : i64} {
  func.func @_matmul_shift_relu_kernel(%arg0: i32, %arg1: memref<8x432xbf16, #tpu.memory_space<vmem>>, %arg2: memref<432x128xbf16, #tpu.memory_space<vmem>>, %arg3: memref<1x128xf32, #tpu.memory_space<vmem>>, %arg4: memref<8x128xbf16, #tpu.memory_space<vmem>>) attributes {dimension_semantics = [#tpu.dimension_semantics<parallel>], iteration_bounds = array<i64: 4>, scalar_prefetch = 0 : i64, scratch_operands = 0 : i64, tpu.core_type = #tpu.core_type<tc>, window_params = [{transform_indices = @transform_0, window_bounds = array<i64: 8, 432>}, {pipeline_mode = #tpu.pipeline_mode<synchronous>, transform_indices = @transform_1, window_bounds = array<i64: 432, 128>}, {pipeline_mode = #tpu.pipeline_mode<synchronous>, transform_indices = @transform_2, window_bounds = array<i64: 1, 128>}, {transform_indices = @transform_3, window_bounds = array<i64: 8, 128>}]} {
    %c0 = arith.constant 0 : index
    %c0_0 = arith.constant 0 : index
    %0 = vector.load %arg1[%c0, %c0_0] : memref<8x432xbf16, #tpu.memory_space<vmem>>, vector<8x432xbf16>
    %c0_1 = arith.constant 0 : index
    %c0_2 = arith.constant 0 : index
    %1 = vector.load %arg2[%c0_1, %c0_2] : memref<432x128xbf16, #tpu.memory_space<vmem>>, vector<432x128xbf16>
    %cst = arith.constant dense<0.000000e+00> : vector<8x128xf32>
    %2 = tpu.matmul %0, %1, %cst {dimension_numbers = #tpu.dot_dimension_numbers<[1], [0], [0], [1], [0, 0, 1, 1], [], []>} : vector<8x432xbf16>, vector<432x128xbf16>, vector<8x128xf32> -> vector<8x128xf32>
    %c0_3 = arith.constant 0 : index
    %c0_4 = arith.constant 0 : index
    %3 = vector.load %arg3[%c0_3, %c0_4] : memref<1x128xf32, #tpu.memory_space<vmem>>, vector<1x128xf32>
    %4 = vector.broadcast %3 : vector<1x128xf32> to vector<8x128xf32>
    %5 = arith.addf %2, %4 : vector<8x128xf32>
    %cst_5 = arith.constant 0.000000e+00 : f32
    %6 = vector.broadcast %cst_5 : f32 to vector<8x128xf32>
    %7 = arith.maximumf %5, %6 : vector<8x128xf32>
    %8 = arith.truncf %7 : vector<8x128xf32> to vector<8x128xbf16>
    %c0_6 = arith.constant 0 : index
    %c0_7 = arith.constant 0 : index
    %9 = vector.load %arg4[%c0_6, %c0_7] : memref<8x128xbf16, #tpu.memory_space<vmem>>, vector<8x128xbf16>
    tpu.vector_store %arg4[%c0_6, %c0_7], %8 {strides = array<i32>} : memref<8x128xbf16, #tpu.memory_space<vmem>>, vector<8x128xbf16>,
    return
  }
  func.func @transform_0(%arg0: i32) -> (i32, i32) {
    %c0_i32 = arith.constant 0 : i32
    %c0_i32_0 = arith.constant 0 : i32
    return %arg0, %c0_i32 : i32, i32
  }
  func.func @transform_1(%arg0: i32) -> (i32, i32) {
    %c0_i32 = arith.constant 0 : i32
    %c0_i32_0 = arith.constant 0 : i32
    %c0_i32_1 = arith.constant 0 : i32
    return %c0_i32, %c0_i32_0 : i32, i32
  }
  func.func @transform_2(%arg0: i32) -> (i32, i32) {
    %c0_i32 = arith.constant 0 : i32
    %c0_i32_0 = arith.constant 0 : i32
    %c0_i32_1 = arith.constant 0 : i32
    return %c0_i32, %c0_i32_0 : i32, i32
  }
  func.func @transform_3(%arg0: i32) -> (i32, i32) {
    %c0_i32 = arith.constant 0 : i32
    %c0_i32_0 = arith.constant 0 : i32
    return %arg0, %c0_i32 : i32, i32
  }
}

module attributes {stable_mosaic.version = 11 : i64} {
  func.func @_matmul_shift_relu_kernel(%arg0: i32, %arg1: memref<8x576xbf16, #tpu.memory_space<vmem>>, %arg2: memref<576x128xbf16, #tpu.memory_space<vmem>>, %arg3: memref<1x128xf32, #tpu.memory_space<vmem>>, %arg4: memref<8x128xbf16, #tpu.memory_space<vmem>>) attributes {dimension_semantics = [#tpu.dimension_semantics<parallel>], iteration_bounds = array<i64: 2>, scalar_prefetch = 0 : i64, scratch_operands = 0 : i64, tpu.core_type = #tpu.core_type<tc>, window_params = [{transform_indices = @transform_0, window_bounds = array<i64: 8, 576>}, {pipeline_mode = #tpu.pipeline_mode<synchronous>, transform_indices = @transform_1, window_bounds = array<i64: 576, 128>}, {pipeline_mode = #tpu.pipeline_mode<synchronous>, transform_indices = @transform_2, window_bounds = array<i64: 1, 128>}, {transform_indices = @transform_3, window_bounds = array<i64: 8, 128>}]} {
    %c0 = arith.constant 0 : index
    %c0_0 = arith.constant 0 : index
    %0 = vector.load %arg1[%c0, %c0_0] : memref<8x576xbf16, #tpu.memory_space<vmem>>, vector<8x576xbf16>
    %c0_1 = arith.constant 0 : index
    %c0_2 = arith.constant 0 : index
    %1 = vector.load %arg2[%c0_1, %c0_2] : memref<576x128xbf16, #tpu.memory_space<vmem>>, vector<576x128xbf16>
    %cst = arith.constant dense<0.000000e+00> : vector<8x128xf32>
    %2 = tpu.matmul %0, %1, %cst {dimension_numbers = #tpu.dot_dimension_numbers<[1], [0], [0], [1], [0, 0, 1, 1], [], []>} : vector<8x576xbf16>, vector<576x128xbf16>, vector<8x128xf32> -> vector<8x128xf32>
    %c0_3 = arith.constant 0 : index
    %c0_4 = arith.constant 0 : index
    %3 = vector.load %arg3[%c0_3, %c0_4] : memref<1x128xf32, #tpu.memory_space<vmem>>, vector<1x128xf32>
    %4 = vector.broadcast %3 : vector<1x128xf32> to vector<8x128xf32>
    %5 = arith.addf %2, %4 : vector<8x128xf32>
    %cst_5 = arith.constant 0.000000e+00 : f32
    %6 = vector.broadcast %cst_5 : f32 to vector<8x128xf32>
    %7 = arith.maximumf %5, %6 : vector<8x128xf32>
    %8 = arith.truncf %7 : vector<8x128xf32> to vector<8x128xbf16>
    %c0_6 = arith.constant 0 : index
    %c0_7 = arith.constant 0 : index
    %9 = vector.load %arg4[%c0_6, %c0_7] : memref<8x128xbf16, #tpu.memory_space<vmem>>, vector<8x128xbf16>
    tpu.vector_store %arg4[%c0_6, %c0_7], %8 {strides = array<i32>} : memref<8x128xbf16, #tpu.memory_space<vmem>>, vector<8x128xbf16>,
    return
  }
  func.func @transform_0(%arg0: i32) -> (i32, i32) {
    %c0_i32 = arith.constant 0 : i32
    %c0_i32_0 = arith.constant 0 : i32
    return %arg0, %c0_i32 : i32, i32
  }
  func.func @transform_1(%arg0: i32) -> (i32, i32) {
    %c0_i32 = arith.constant 0 : i32
    %c0_i32_0 = arith.constant 0 : i32
    %c0_i32_1 = arith.constant 0 : i32
    return %c0_i32, %c0_i32_0 : i32, i32
  }
  func.func @transform_2(%arg0: i32) -> (i32, i32) {
    %c0_i32 = arith.constant 0 : i32
    %c0_i32_0 = arith.constant 0 : i32
    %c0_i32_1 = arith.constant 0 : i32
    return %c0_i32, %c0_i32_0 : i32, i32
  }
  func.func @transform_3(%arg0: i32) -> (i32, i32) {
    %c0_i32 = arith.constant 0 : i32
    %c0_i32_0 = arith.constant 0 : i32
    return %arg0, %c0_i32 : i32, i32
  }
}

module attributes {stable_mosaic.version = 11 : i64} {
  func.func @_matmul_shift_relu_kernel(%arg0: i32, %arg1: memref<8x576xbf16, #tpu.memory_space<vmem>>, %arg2: memref<576x128xbf16, #tpu.memory_space<vmem>>, %arg3: memref<1x128xf32, #tpu.memory_space<vmem>>, %arg4: memref<8x128xbf16, #tpu.memory_space<vmem>>) attributes {dimension_semantics = [#tpu.dimension_semantics<parallel>], iteration_bounds = array<i64: 1>, scalar_prefetch = 0 : i64, scratch_operands = 0 : i64, tpu.core_type = #tpu.core_type<tc>, window_params = [{transform_indices = @transform_0, window_bounds = array<i64: 8, 576>}, {pipeline_mode = #tpu.pipeline_mode<synchronous>, transform_indices = @transform_1, window_bounds = array<i64: 576, 128>}, {pipeline_mode = #tpu.pipeline_mode<synchronous>, transform_indices = @transform_2, window_bounds = array<i64: 1, 128>}, {transform_indices = @transform_3, window_bounds = array<i64: 8, 128>}]} {
    %c0 = arith.constant 0 : index
    %c0_0 = arith.constant 0 : index
    %0 = vector.load %arg1[%c0, %c0_0] : memref<8x576xbf16, #tpu.memory_space<vmem>>, vector<8x576xbf16>
    %c0_1 = arith.constant 0 : index
    %c0_2 = arith.constant 0 : index
    %1 = vector.load %arg2[%c0_1, %c0_2] : memref<576x128xbf16, #tpu.memory_space<vmem>>, vector<576x128xbf16>
    %cst = arith.constant dense<0.000000e+00> : vector<8x128xf32>
    %2 = tpu.matmul %0, %1, %cst {dimension_numbers = #tpu.dot_dimension_numbers<[1], [0], [0], [1], [0, 0, 1, 1], [], []>} : vector<8x576xbf16>, vector<576x128xbf16>, vector<8x128xf32> -> vector<8x128xf32>
    %c0_3 = arith.constant 0 : index
    %c0_4 = arith.constant 0 : index
    %3 = vector.load %arg3[%c0_3, %c0_4] : memref<1x128xf32, #tpu.memory_space<vmem>>, vector<1x128xf32>
    %4 = vector.broadcast %3 : vector<1x128xf32> to vector<8x128xf32>
    %5 = arith.addf %2, %4 : vector<8x128xf32>
    %cst_5 = arith.constant 0.000000e+00 : f32
    %6 = vector.broadcast %cst_5 : f32 to vector<8x128xf32>
    %7 = arith.maximumf %5, %6 : vector<8x128xf32>
    %8 = arith.truncf %7 : vector<8x128xf32> to vector<8x128xbf16>
    %c0_6 = arith.constant 0 : index
    %c0_7 = arith.constant 0 : index
    %9 = vector.load %arg4[%c0_6, %c0_7] : memref<8x128xbf16, #tpu.memory_space<vmem>>, vector<8x128xbf16>
    tpu.vector_store %arg4[%c0_6, %c0_7], %8 {strides = array<i32>} : memref<8x128xbf16, #tpu.memory_space<vmem>>, vector<8x128xbf16>,
    return
  }
  func.func @transform_0(%arg0: i32) -> (i32, i32) {
    %c0_i32 = arith.constant 0 : i32
    %c0_i32_0 = arith.constant 0 : i32
    return %arg0, %c0_i32 : i32, i32
  }
  func.func @transform_1(%arg0: i32) -> (i32, i32) {
    %c0_i32 = arith.constant 0 : i32
    %c0_i32_0 = arith.constant 0 : i32
    %c0_i32_1 = arith.constant 0 : i32
    return %c0_i32, %c0_i32_0 : i32, i32
  }
  func.func @transform_2(%arg0: i32) -> (i32, i32) {
    %c0_i32 = arith.constant 0 : i32
    %c0_i32_0 = arith.constant 0 : i32
    %c0_i32_1 = arith.constant 0 : i32
    return %c0_i32, %c0_i32_0 : i32, i32
  }
  func.func @transform_3(%arg0: i32) -> (i32, i32) {
    %c0_i32 = arith.constant 0 : i32
    %c0_i32_0 = arith.constant 0 : i32
    return %arg0, %c0_i32 : i32, i32
  }
}

module attributes {stable_mosaic.version = 11 : i64} {
  func.func @_matmul_shift_relu_proj_kernel(%arg0: i32, %arg1: memref<8x288xbf16, #tpu.memory_space<vmem>>, %arg2: memref<288x64xbf16, #tpu.memory_space<vmem>>, %arg3: memref<1x64xf32, #tpu.memory_space<vmem>>, %arg4: memref<64x64xbf16, #tpu.memory_space<vmem>>, %arg5: memref<1x64xf32, #tpu.memory_space<vmem>>, %arg6: memref<8x64xbf16, #tpu.memory_space<vmem>>) attributes {dimension_semantics = [#tpu.dimension_semantics<parallel>], iteration_bounds = array<i64: 1>, scalar_prefetch = 0 : i64, scratch_operands = 0 : i64, tpu.core_type = #tpu.core_type<tc>, window_params = [{transform_indices = @transform_0, window_bounds = array<i64: 8, 288>}, {pipeline_mode = #tpu.pipeline_mode<synchronous>, transform_indices = @transform_1, window_bounds = array<i64: 288, 64>}, {pipeline_mode = #tpu.pipeline_mode<synchronous>, transform_indices = @transform_2, window_bounds = array<i64: 1, 64>}, {pipeline_mode = #tpu.pipeline_mode<synchronous>, transform_indices = @transform_3, window_bounds = array<i64: 64, 64>}, {pipeline_mode = #tpu.pipeline_mode<synchronous>, transform_indices = @transform_4, window_bounds = array<i64: 1, 64>}, {transform_indices = @transform_5, window_bounds = array<i64: 8, 64>}]} {
    %c0 = arith.constant 0 : index
    %c0_0 = arith.constant 0 : index
    %0 = vector.load %arg1[%c0, %c0_0] : memref<8x288xbf16, #tpu.memory_space<vmem>>, vector<8x288xbf16>
    %c0_1 = arith.constant 0 : index
    %c0_2 = arith.constant 0 : index
    %1 = vector.load %arg2[%c0_1, %c0_2] : memref<288x64xbf16, #tpu.memory_space<vmem>>, vector<288x64xbf16>
    %cst = arith.constant dense<0.000000e+00> : vector<8x64xf32>
    %2 = tpu.matmul %0, %1, %cst {dimension_numbers = #tpu.dot_dimension_numbers<[1], [0], [0], [1], [0, 0, 1, 1], [], []>} : vector<8x288xbf16>, vector<288x64xbf16>, vector<8x64xf32> -> vector<8x64xf32>
    %c0_3 = arith.constant 0 : index
    %c0_4 = arith.constant 0 : index
    %3 = vector.load %arg3[%c0_3, %c0_4] : memref<1x64xf32, #tpu.memory_space<vmem>>, vector<1x64xf32>
    %4 = vector.broadcast %3 : vector<1x64xf32> to vector<8x64xf32>
    %5 = arith.addf %2, %4 : vector<8x64xf32>
    %cst_5 = arith.constant 0.000000e+00 : f32
    %6 = vector.broadcast %cst_5 : f32 to vector<8x64xf32>
    %7 = arith.maximumf %5, %6 : vector<8x64xf32>
    %8 = arith.truncf %7 : vector<8x64xf32> to vector<8x64xbf16>
    %c0_6 = arith.constant 0 : index
    %c0_7 = arith.constant 0 : index
    %9 = vector.load %arg4[%c0_6, %c0_7] : memref<64x64xbf16, #tpu.memory_space<vmem>>, vector<64x64xbf16>
    %cst_8 = arith.constant dense<0.000000e+00> : vector<8x64xf32>
    %10 = tpu.matmul %8, %9, %cst_8 {dimension_numbers = #tpu.dot_dimension_numbers<[1], [0], [0], [1], [0, 0, 1, 1], [], []>} : vector<8x64xbf16>, vector<64x64xbf16>, vector<8x64xf32> -> vector<8x64xf32>
    %c0_9 = arith.constant 0 : index
    %c0_10 = arith.constant 0 : index
    %11 = vector.load %arg5[%c0_9, %c0_10] : memref<1x64xf32, #tpu.memory_space<vmem>>, vector<1x64xf32>
    %12 = vector.broadcast %11 : vector<1x64xf32> to vector<8x64xf32>
    %13 = arith.addf %10, %12 : vector<8x64xf32>
    %14 = arith.truncf %13 : vector<8x64xf32> to vector<8x64xbf16>
    %c0_11 = arith.constant 0 : index
    %c0_12 = arith.constant 0 : index
    %15 = vector.load %arg6[%c0_11, %c0_12] : memref<8x64xbf16, #tpu.memory_space<vmem>>, vector<8x64xbf16>
    tpu.vector_store %arg6[%c0_11, %c0_12], %14 {strides = array<i32>} : memref<8x64xbf16, #tpu.memory_space<vmem>>, vector<8x64xbf16>,
    return
  }
  func.func @transform_0(%arg0: i32) -> (i32, i32) {
    %c0_i32 = arith.constant 0 : i32
    %c0_i32_0 = arith.constant 0 : i32
    return %arg0, %c0_i32 : i32, i32
  }
  func.func @transform_1(%arg0: i32) -> (i32, i32) {
    %c0_i32 = arith.constant 0 : i32
    %c0_i32_0 = arith.constant 0 : i32
    %c0_i32_1 = arith.constant 0 : i32
    return %c0_i32, %c0_i32_0 : i32, i32
  }
  func.func @transform_2(%arg0: i32) -> (i32, i32) {
    %c0_i32 = arith.constant 0 : i32
    %c0_i32_0 = arith.constant 0 : i32
    %c0_i32_1 = arith.constant 0 : i32
    return %c0_i32, %c0_i32_0 : i32, i32
  }
  func.func @transform_3(%arg0: i32) -> (i32, i32) {
    %c0_i32 = arith.constant 0 : i32
    %c0_i32_0 = arith.constant 0 : i32
    %c0_i32_1 = arith.constant 0 : i32
    return %c0_i32, %c0_i32_0 : i32, i32
  }
  func.func @transform_4(%arg0: i32) -> (i32, i32) {
    %c0_i32 = arith.constant 0 : i32
    %c0_i32_0 = arith.constant 0 : i32
    %c0_i32_1 = arith.constant 0 : i32
    return %c0_i32, %c0_i32_0 : i32, i32
  }
  func.func @transform_5(%arg0: i32) -> (i32, i32) {
    %c0_i32 = arith.constant 0 : i32
    %c0_i32_0 = arith.constant 0 : i32
    return %arg0, %c0_i32 : i32, i32
  }
}

</mosaic_0001>

<llo_original>
// kernel: conv_stem_forward.4
$region0: #{conv_stem_forward.4}
  #allocation0 [shape = 'u32[]', space=smem, size = 0x4, offset = 0x4, fixed_abs, tag = 'smem constant byte address 0x4 - core index']
  #allocation1 [shape = 'u32[144,128]{1,0:T(1,128)}', space=vmem, size = 0x12000, scoped, tag = 'internal scratch']
  %s0 = inlined_call_operand.vmem [shape: bf16[32,432], index: 0, kind: input, shape index: {}]
  %s1 = inlined_call_operand.vmem [shape: bf16[432,128], index: 1, kind: input, shape index: {}]
  %s2 = inlined_call_operand.vmem [shape: f32[1,128], index: 2, kind: input, shape index: {}]
  %s3 = inlined_call_operand.vmem [shape: bf16[32,128], index: 3, kind: output, shape index: {}]
  %s4 = sld [smem:[#allocation0]]
  $region45: #{conv_stem_forward.4} parent=0
    _
  %s6 = ssub.s32 1, %s4
  %s7 = scalar_select 0, %s6, %s4
  loop: start=0, step=1, limit=6
  $region2: #{conv_stem_forward.4} parent=0 // loop_pre_header
    _
  $region3: #{conv_stem_forward.4} parent=0 // loop_header
    %s9 = sphi 0, %s13
    %p10 = scmp.ge.s32.totalorder %s9, 6
    %s19 = sphi 0, %s21
    %s22 = sphi 0, %s19
    %s23 = sphi 0, %s22
    %s39 = sphi 0, %s23
    %s43 = sphi 0, %s43
    %s45 = sphi 0, %s43
    %s46 = sphi 0, %s45
    %s60 = sphi 0, %s46
    %s64 = sphi 0, %s64
    %s66 = sphi 0, %s64
    %s67 = sphi 0, %s66
    %s81 = sphi 0, %s67
    %s87 = sphi 0, %s89
    %s90 = sphi 0, %s87
    %s91 = sphi 0, %s90
    %s107 = sphi 0, %s91
  $region4: #{conv_stem_forward.4} parent=0 // loop_header_branch
    %12 = sbr.rel (%p10) target = $region8
  $region5: #{conv_stem_forward.4} parent=0 // loop_body
    %s14 = ssub.s32 %s9, 1
    %s15 = ssub.s32 %s9, 2
    %s16 = sadd.s32 %s9, 1
    %s17 = ssub.s32 %s9, %s16
    %p18 = scmp.eq.s32.totalorder %s17, 0
    %s20 = sadd.s32 %s19, 1
    %s21 = scalar_select %p18, %s19, %s20
    %p24 = pneg %p18
    %p25 = scmp.eq.s32.totalorder %s9, 3
    %p26 = por %p24, %p25
    %p27 = scmp.ne.s32.totalorder %s19, %s22
    %p28 = scmp.eq.s32.totalorder %s9, 0
    %p29 = por %p27, %p28
    %p30 = scmp.ne.s32.totalorder %s19, %s22
    %p31 = scmp.eq.s32.totalorder %s14, 3
    %p32 = por %p30, %p31
    %p33 = scmp.ne.s32.totalorder %s22, %s23
    %p34 = scmp.eq.s32.totalorder %s14, 0
    %p35 = por %p33, %p34
    %p36 = scmp.ne.s32.totalorder %s22, %s23
    %p37 = scmp.eq.s32.totalorder %s15, 3
    %p38 = por %p36, %p37
    %p40 = scmp.ne.s32.totalorder %s23, %s39
    %p41 = scmp.eq.s32.totalorder %s15, 0
    %p42 = por %p40, %p41
    %s44 = sadd.s32 %s43, 1
    %p47 = scmp.eq.s32.totalorder %s9, 3
    %p48 = scmp.ne.s32.totalorder %s43, %s45
    %p49 = scmp.eq.s32.totalorder %s9, 0
    %p50 = por %p48, %p49
    %p51 = scmp.ne.s32.totalorder %s43, %s45
    %p52 = scmp.eq.s32.totalorder %s14, 3
    %p53 = por %p51, %p52
    %p54 = scmp.ne.s32.totalorder %s45, %s46
    %p55 = scmp.eq.s32.totalorder %s14, 0
    %p56 = por %p54, %p55
    %p57 = scmp.ne.s32.totalorder %s45, %s46
    %p58 = scmp.eq.s32.totalorder %s15, 3
    %p59 = por %p57, %p58
    %p61 = scmp.ne.s32.totalorder %s46, %s60
    %p62 = scmp.eq.s32.totalorder %s15, 0
    %p63 = por %p61, %p62
    %s65 = sadd.s32 %s64, 1
    %p68 = scmp.eq.s32.totalorder %s9, 3
    %p69 = scmp.ne.s32.totalorder %s64, %s66
    %p70 = scmp.eq.s32.totalorder %s9, 0
    %p71 = por %p69, %p70
    %p72 = scmp.ne.s32.totalorder %s64, %s66
    %p73 = scmp.eq.s32.totalorder %s14, 3
    %p74 = por %p72, %p73
    %p75 = scmp.ne.s32.totalorder %s66, %s67
    %p76 = scmp.eq.s32.totalorder %s14, 0
    %p77 = por %p75, %p76
    %p78 = scmp.ne.s32.totalorder %s66, %s67
    %p79 = scmp.eq.s32.totalorder %s15, 3
    %p80 = por %p78, %p79
    %p82 = scmp.ne.s32.totalorder %s67, %s81
    %p83 = scmp.eq.s32.totalorder %s15, 0
    %p84 = por %p82, %p83
    %s85 = ssub.s32 %s9, %s16
    %p86 = scmp.eq.s32.totalorder %s85, 0
    %s88 = sadd.s32 %s87, 1
    %s89 = scalar_select %p86, %s87, %s88
    %p92 = pneg %p86
    %p93 = scmp.eq.s32.totalorder %s9, 3
    %p94 = por %p92, %p93
    %p95 = scmp.ne.s32.totalorder %s87, %s90
    %p96 = scmp.eq.s32.totalorder %s9, 0
    %p97 = por %p95, %p96
    %p98 = scmp.ne.s32.totalorder %s87, %s90
    %p99 = scmp.eq.s32.totalorder %s14, 3
    %p100 = por %p98, %p99
    %p101 = scmp.ne.s32.totalorder %s90, %s91
    %p102 = scmp.eq.s32.totalorder %s14, 0
    %p103 = por %p101, %p102
    %p104 = scmp.ne.s32.totalorder %s90, %s91
    %p105 = scmp.eq.s32.totalorder %s15, 3
    %p106 = por %p104, %p105
    %p108 = scmp.ne.s32.totalorder %s91, %s107
    %p109 = scmp.eq.s32.totalorder %s15, 0
    %p110 = por %p108, %p109
    %p111 = scmp.le.s32.totalorder 1, %s9
    %p112 = scmp.lt.s32.totalorder %s9, 5
    %p113 = pnand %p111, %p112
    %p114 = pneg %p113
    // Predicated region
    $region9: #{conv_stem_forward.4} parent=5 // pred_check
      _
    $region10: #{conv_stem_forward.4} parent=5 // pred_check_branch
      %116 = sbr.rel (%p113) target = $region12
    $region11: #{conv_stem_forward.4} parent=5 // pred_region
      %s117 = ssub.s32 %s9, 1
      // Predicated region
      $region13: #{conv_stem_forward.4} parent=11 // pred_check
        %p118 = pneg %p56
      $region14: #{conv_stem_forward.4} parent=11 // pred_check_branch
        %120 = sbr.rel (%p118) target = $region16
      $region15: #{conv_stem_forward.4} parent=11 // pred_region
        _
      $region16: #{conv_stem_forward.4} parent=11 // pred_fallthru
        _
      // Predicated region
      $region17: #{conv_stem_forward.4} parent=11 // pred_check
        %p121 = pneg %p77
      $region18: #{conv_stem_forward.4} parent=11 // pred_check_branch
        %123 = sbr.rel (%p121) target = $region20
      $region19: #{conv_stem_forward.4} parent=11 // pred_region
        _
      $region20: #{conv_stem_forward.4} parent=11 // pred_fallthru
        _
    $region12: #{conv_stem_forward.4} parent=5 // pred_fallthru
      _
    %p124 = scmp.lt.s32.totalorder %s9, 4
    // Predicated region
    $region21: #{conv_stem_forward.4} parent=5 // pred_check
      %p125 = pneg %p124
    $region22: #{conv_stem_forward.4} parent=5 // pred_check_branch
      %127 = sbr.rel (%p125) target = $region24
    $region23: #{conv_stem_forward.4} parent=5 // pred_region
      // Predicated region
      $region25: #{conv_stem_forward.4} parent=23 // pred_check
        %p128 = pneg %p29
      $region26: #{conv_stem_forward.4} parent=23 // pred_check_branch
        %130 = sbr.rel (%p128) target = $region28
      $region27: #{conv_stem_forward.4} parent=23 // pred_region
        %p131 = scmp.lt.s32.totalorder %s9, 3
        %s132 = scalar_select %p131, %s9, 3
        %s133 = smul.addr %s132, 4
        %s134 = smul.addr %s133, 4
        %s135 = scalar_lea.vmem %s0, %s134
      $region28: #{conv_stem_forward.4} parent=23 // pred_fallthru
        _
    $region24: #{conv_stem_forward.4} parent=5 // pred_fallthru
      _
    %p136 = scmp.le.s32.totalorder 1, %s9
    %p137 = scmp.lt.s32.totalorder %s9, 5
    %p138 = pnand %p136, %p137
    %p139 = pneg %p138
    // Predicated region
    $region29: #{conv_stem_forward.4} parent=5 // pred_check
      _
    $region30: #{conv_stem_forward.4} parent=5 // pred_check_branch
      %141 = sbr.rel (%p138) target = $region32
    $region31: #{conv_stem_forward.4} parent=5 // pred_region
      %s142 = ssub.s32 %s9, 1
      %p143 = scmp.lt.s32.totalorder %s14, 3
      %s144 = scalar_select %p143, %s14, 3
      %s145 = smul.addr %s144, 4
      %s146 = smul.addr %s145, 4
      %s147 = scalar_lea.vmem %s0, %s146
      %p148 = pneg %p35
      %p149 = pneg %p32
      %p150 = pneg %p56
      %p151 = pneg %p53
      %p152 = pneg %p77
      %p153 = pneg %p74
      %p154 = pneg %p103
      %p155 = pneg %p100
      %p156 = scmp.lt.s32.totalorder %s14, 3
      %s157 = scalar_select %p156, %s14, 3
      %s158 = smul.addr %s157, 4
      %s159 = scalar_lea.vmem %s3, %s158
      %p160 = scmp.lt.s32.totalorder %s14, 3
      %s161 = scalar_select %p160, %s14, 3
      %s162 = smul.addr %s161, 4
      %s163 = smul.addr %s162, 4
      %s164 = scalar_lea.vmem %s0, %s163
      %p165 = scmp.lt.s32.totalorder %s14, 3
      %s166 = scalar_select %p165, %s14, 3
      %s167 = smul.addr %s166, 4
      %s168 = scalar_lea.vmem %s3, %s167
      %v170 = vld [vmem:[%s164] sm:$0xff]
      %v171 = vld [vmem:[%s164 + $0x8] sm:$0xff]
      %v172 = vld [vmem:[%s1] sm:$0xf]
      %v173 = vld [vmem:[%s1 + $0x4] sm:$0xf]
      %v174 = vld [vmem:[%s1 + $0x8] sm:$0xf]
      %v175 = vld [vmem:[%s1 + $0xc] sm:$0xf]
      %v176 = vld [vmem:[%s1 + $0x10] sm:$0xf]
      %v177 = vld [vmem:[%s1 + $0x14] sm:$0xf]
      %v178 = vld [vmem:[%s1 + $0x18] sm:$0xf]
      %v179 = vld [vmem:[%s1 + $0x1c] sm:$0xf]
      %v180 = vld [vmem:[%s1 + $0x20] sm:$0xf]
      %v181 = vld [vmem:[%s1 + $0x24] sm:$0xf]
      %v182 = vld [vmem:[%s1 + $0x28] sm:$0xf]
      %v183 = vld [vmem:[%s1 + $0x2c] sm:$0xf]
      %v184 = vld [vmem:[%s1 + $0x30] sm:$0xf]
      %v185 = vld [vmem:[%s1 + $0x34] sm:$0xf]
      %v186 = vld [vmem:[%s1 + $0x38] sm:$0xf]
      %v187 = vld [vmem:[%s1 + $0x3c] sm:$0xf]
      %v188 = vld [vmem:[%s1 + $0x40] sm:$0xf]
      %v189 = vld [vmem:[%s1 + $0x44] sm:$0xf]
      %v190 = vld [vmem:[%s1 + $0x48] sm:$0xf]
      %v191 = vld [vmem:[%s1 + $0x4c] sm:$0xf]
      %v192 = vld [vmem:[%s1 + $0x50] sm:$0xf]
      %v193 = vld [vmem:[%s1 + $0x54] sm:$0xf]
      %v194 = vld [vmem:[%s1 + $0x58] sm:$0xf]
      %v195 = vld [vmem:[%s1 + $0x5c] sm:$0xf]
      %v196 = vld [vmem:[%s1 + $0x60] sm:$0xf]
      %v197 = vld [vmem:[%s1 + $0x64] sm:$0xf]
      %v198 = vld [vmem:[%s1 + $0x68] sm:$0xf]
      %v199 = vld [vmem:[%s1 + $0x6c] sm:$0xf]
      %v200 = vld [vmem:[%s1 + $0x70] sm:$0xf]
      %v201 = vld [vmem:[%s1 + $0x74] sm:$0xf]
      %v202 = vld [vmem:[%s1 + $0x78] sm:$0xf]
      %v203 = vld [vmem:[%s1 + $0x7c] sm:$0xf]
      %v204 = vld [vmem:[%s1 + $0x80] sm:$0xf]
      %v205 = vld [vmem:[%s1 + $0x84] sm:$0xf]
      %v206 = vld [vmem:[%s1 + $0x88] sm:$0xf]
      %v207 = vld [vmem:[%s1 + $0x8c] sm:$0xf]
      %v208 = vld [vmem:[%s1 + $0x90] sm:$0xf]
      %v209 = vld [vmem:[%s1 + $0x94] sm:$0xf]
      %v210 = vld [vmem:[%s1 + $0x98] sm:$0xf]
      %v211 = vld [vmem:[%s1 + $0x9c] sm:$0xf]
      %v212 = vld [vmem:[%s1 + $0xa0] sm:$0xf]
      %v213 = vld [vmem:[%s1 + $0xa4] sm:$0xf]
      %v214 = vld [vmem:[%s1 + $0xa8] sm:$0xf]
      %v215 = vld [vmem:[%s1 + $0xac] sm:$0xf]
      %v216 = vld [vmem:[%s1 + $0xb0] sm:$0xf]
      %v217 = vld [vmem:[%s1 + $0xb4] sm:$0xf]
      %v218 = vld [vmem:[%s1 + $0xb8] sm:$0xf]
      %v219 = vld [vmem:[%s1 + $0xbc] sm:$0xf]
      %v220 = vld [vmem:[%s1 + $0xc0] sm:$0xf]
      %v221 = vld [vmem:[%s1 + $0xc4] sm:$0xf]
      %v222 = vld [vmem:[%s1 + $0xc8] sm:$0xf]
      %v223 = vld [vmem:[%s1 + $0xcc] sm:$0xf]
      %v224 = vld [vmem:[%s1 + $0xd0] sm:$0xf]
      %v225 = vld [vmem:[%s1 + $0xd4] sm:$0xf]
      %v226 = vld [vmem:[%s2] sm:$0x1]
      %v228 = vlaneseq
      %v229 = vshrl.u32 %v228, 7
      %v230 = vsub.s32 0, %v229
      %v231 = vrot.slane %v226, %v230
      %v235 = vunpack.c.l.b16 %v170
      %v236 = vunpack.c.h.b16 %v170
      %v237 = vunpack.c.l.b16 %v171
      %v238 = vunpack.c.h.b16 %v171
      %v239 = vpack.c.b16 %v235, %v235
      %v240 = vpack.c.b16 %v236, %v236
      %v241 = vpack.c.b16 %v237, %v237
      %v242 = vpack.c.b16 %v238, %v238
      %v300 = vunpack.c.l.b16 %v172
      %v301 = vunpack.c.l.b16 %v173
      %v302 = vunpack.c.l.b16 %v174
      %v303 = vunpack.c.l.b16 %v175
      %v304 = vunpack.c.l.b16 %v176
      %v305 = vunpack.c.l.b16 %v177
      %v306 = vunpack.c.l.b16 %v178
      %v307 = vunpack.c.l.b16 %v179
      %v308 = vunpack.c.l.b16 %v180
      %v309 = vunpack.c.l.b16 %v181
      %v310 = vunpack.c.l.b16 %v182
      %v311 = vunpack.c.l.b16 %v183
      %v312 = vunpack.c.l.b16 %v184
      %v313 = vunpack.c.l.b16 %v185
      %v314 = vunpack.c.l.b16 %v186
      %v315 = vunpack.c.l.b16 %v187
      %v316 = vunpack.c.l.b16 %v188
      %v317 = vunpack.c.l.b16 %v189
      %v318 = vunpack.c.l.b16 %v190
      %v319 = vunpack.c.l.b16 %v191
      %v320 = vunpack.c.l.b16 %v192
      %v321 = vunpack.c.l.b16 %v193
      %v322 = vunpack.c.l.b16 %v194
      %v323 = vunpack.c.l.b16 %v195
      %v324 = vunpack.c.l.b16 %v196
      %v325 = vunpack.c.l.b16 %v197
      %v326 = vunpack.c.l.b16 %v198
      %v327 = vunpack.c.l.b16 %v199
      %v328 = vunpack.c.l.b16 %v200
      %v329 = vunpack.c.l.b16 %v201
      %v330 = vunpack.c.l.b16 %v202
      %v331 = vunpack.c.l.b16 %v203
      %v332 = vunpack.c.l.b16 %v204
      %v333 = vunpack.c.l.b16 %v205
      %v334 = vunpack.c.l.b16 %v206
      %v335 = vunpack.c.l.b16 %v207
      %v336 = vunpack.c.l.b16 %v208
      %v337 = vunpack.c.l.b16 %v209
      %v338 = vunpack.c.l.b16 %v210
      %v339 = vunpack.c.l.b16 %v211
      %v340 = vunpack.c.l.b16 %v212
      %v341 = vunpack.c.l.b16 %v213
      %v342 = vunpack.c.l.b16 %v214
      %v343 = vunpack.c.l.b16 %v215
      %v344 = vunpack.c.l.b16 %v216
      %v345 = vunpack.c.l.b16 %v217
      %v346 = vunpack.c.l.b16 %v218
      %v347 = vunpack.c.l.b16 %v219
      %v348 = vunpack.c.l.b16 %v220
      %v349 = vunpack.c.l.b16 %v221
      %v350 = vunpack.c.l.b16 %v222
      %v351 = vunpack.c.l.b16 %v223
      %v352 = vunpack.c.l.b16 %v224
      %v353 = vunpack.c.l.b16 %v225
      %v354 = vpack.c.b16 %v301, %v300
      %v355 = vpack.c.b16 %v303, %v302
      %v356 = vpack.c.b16 %v305, %v304
      %v357 = vpack.c.b16 %v307, %v306
      %v358 = vpack.c.b16 %v309, %v308
      %v359 = vpack.c.b16 %v311, %v310
      %v360 = vpack.c.b16 %v313, %v312
      %v361 = vpack.c.b16 %v315, %v314
      %v362 = vpack.c.b16 %v317, %v316
      %v363 = vpack.c.b16 %v319, %v318
      %v364 = vpack.c.b16 %v321, %v320
      %v365 = vpack.c.b16 %v323, %v322
      %v366 = vpack.c.b16 %v325, %v324
      %v367 = vpack.c.b16 %v327, %v326
      %v368 = vpack.c.b16 %v329, %v328
      %v369 = vpack.c.b16 %v331, %v330
      %v370 = vpack.c.b16 %v333, %v332
      %v371 = vpack.c.b16 %v335, %v334
      %v372 = vpack.c.b16 %v337, %v336
      %v373 = vpack.c.b16 %v339, %v338
      %v374 = vpack.c.b16 %v341, %v340
      %v375 = vpack.c.b16 %v343, %v342
      %v376 = vpack.c.b16 %v345, %v344
      %v377 = vpack.c.b16 %v347, %v346
      %v378 = vpack.c.b16 %v349, %v348
      %v379 = vpack.c.b16 %v351, %v350
      %v380 = vpack.c.b16 %v353, %v352
      %vm408 = vcmask 392192
      %v410 = vsel %vm408, %v242, 0
      %412 = vmatprep.subr.bf16.mxu0 0
      %413 = vmatpush1.bf16.msra.mxu0 %v354
      %414 = vmatprep.subr.bf16.mxu0 0
      %415 = vmatpush1.bf16.msra.mxu0 %v355
      %416 = vmatprep.subr.bf16.mxu0 0
      %417 = vmatpush1.bf16.msra.mxu0 %v356
      %418 = vmatprep.subr.bf16.mxu0 0
      %419 = vmatpush1.bf16.msra.mxu0 %v357
      %420 = vmatprep.subr.bf16.mxu0 0
      %421 = vmatpush1.bf16.msra.mxu0 %v358
      %422 = vmatprep.subr.bf16.mxu0 0
      %423 = vmatpush1.bf16.msra.mxu0 %v359
      %424 = vmatprep.subr.bf16.mxu0 0
      %425 = vmatpush1.bf16.msra.mxu0 %v360
      %426 = vmatprep.subr.bf16.mxu0 0
      %427 = vmatpush1.bf16.msra.mxu0 %v361
      %428 = vmatprep.subr.bf16.mxu0 0
      %429 = vmatpush1.bf16.msra.mxu0 %v362
      %430 = vmatprep.subr.bf16.mxu0 0
      %431 = vmatpush1.bf16.msra.mxu0 %v363
      %432 = vmatprep.subr.bf16.mxu0 0
      %433 = vmatpush1.bf16.msra.mxu0 %v364
      %434 = vmatprep.subr.bf16.mxu0 0
      %435 = vmatpush1.bf16.msra.mxu0 %v365
      %436 = vmatprep.subr.bf16.mxu0 0
      %437 = vmatpush1.bf16.msra.mxu0 %v366
      %438 = vmatprep.subr.bf16.mxu0 0
      %439 = vmatpush1.bf16.msra.mxu0 %v367
      %440 = vmatprep.subr.bf16.mxu0 0
      %441 = vmatpush1.bf16.msra.mxu0 %v368
      %442 = vmatprep.subr.bf16.mxu0 0
      %443 = vmatpush1.bf16.msra.mxu0 %v369
      %444 = vmatprep.mubr.bf16.mxu0 %v240
      %445 = vmatmul.mubr.bf16.gmra.mrb[0].mxu0 %v239
      %v446 = vpop.f32.mrb[0].mxu0
      %v447 = vadd.f32 %v231, %v446
      %v448 = vpop.f32.mrb[0].mxu0
      %v449 = vpop.f32.mrb[0].mxu0
      %v450 = vpop.f32.mrb[0].mxu0
      %451 = vdwg.mxu0
      %452 = vmatprep.subr.bf16.mxu0 0
      %453 = vmatpush1.bf16.msra.mxu0 %v370
      %454 = vmatprep.subr.bf16.mxu0 0
      %455 = vmatpush1.bf16.msra.mxu0 %v371
      %456 = vmatprep.subr.bf16.mxu0 0
      %457 = vmatpush1.bf16.msra.mxu0 %v372
      %458 = vmatprep.subr.bf16.mxu0 0
      %459 = vmatpush1.bf16.msra.mxu0 %v373
      %460 = vmatprep.subr.bf16.mxu0 0
      %461 = vmatpush1.bf16.msra.mxu0 %v374
      %462 = vmatprep.subr.bf16.mxu0 0
      %463 = vmatpush1.bf16.msra.mxu0 %v375
      %464 = vmatprep.subr.bf16.mxu0 0
      %465 = vmatpush1.bf16.msra.mxu0 %v376
      %466 = vmatprep.subr.bf16.mxu0 0
      %467 = vmatpush1.bf16.msra.mxu0 %v377
      %468 = vmatprep.subr.bf16.mxu0 0
      %469 = vmatpush1.bf16.msra.mxu0 %v378
      %470 = vmatprep.subr.bf16.mxu0 0
      %471 = vmatpush1.bf16.msra.mxu0 %v379
      %472 = vmatprep.subr.bf16.mxu0 0
      %473 = vmatpush1.bf16.msra.mxu0 %v380
      %474 = vmatprep.subr.bf16.mxu0 0
      %475 = vmatpush1.bf16.msra.mxu0 0
      %476 = vmatprep.subr.bf16.mxu0 0
      %477 = vmatpush1.bf16.msra.mxu0 0
      %478 = vmatprep.subr.bf16.mxu0 0
      %479 = vmatpush1.bf16.msra.mxu0 0
      %480 = vmatprep.subr.bf16.mxu0 0
      %481 = vmatpush1.bf16.msra.mxu0 0
      %482 = vmatprep.subr.bf16.mxu0 0
      %483 = vmatpush1.bf16.msra.mxu0 0
      %484 = vmatprep.mubr.bf16.mxu0 %v410
      %485 = vmatmul.mubr.bf16.gmra.mrb[0].mxu0 %v241
      %v486 = vpop.f32.mrb[0].mxu0
      %v487 = vadd.f32 %v447, %v486
      %v488 = vpop.f32.mrb[0].mxu0
      %v489 = vpop.f32.mrb[0].mxu0
      %v490 = vpop.f32.mrb[0].mxu0
      %491 = vdwg.mxu0
      %v492 = vmax.f32 %v487, 0.0
      %v493 = vpack.c.bf16 %v492, %v492
      %494 = vst [vmem:[%s168] sm:$0xf] %v493
      %p495 = scmp.lt.s32.totalorder %s14, 3
      %s496 = scalar_select %p495, %s14, 3
      %s497 = smul.addr %s496, 4
      %s498 = scalar_lea.vmem %s3, %s497
      // Predicated region
      $region33: #{conv_stem_forward.4} parent=31 // pred_check
        %p499 = pneg %p100
      $region34: #{conv_stem_forward.4} parent=31 // pred_check_branch
        %501 = sbr.rel (%p499) target = $region36
      $region35: #{conv_stem_forward.4} parent=31 // pred_region
        _
      $region36: #{conv_stem_forward.4} parent=31 // pred_fallthru
        _
    $region32: #{conv_stem_forward.4} parent=5 // pred_fallthru
      _
    %p502 = scmp.le.s32.totalorder 2, %s9
    // Predicated region
    $region37: #{conv_stem_forward.4} parent=5 // pred_check
      %p503 = pneg %p502
    $region38: #{conv_stem_forward.4} parent=5 // pred_check_branch
      %505 = sbr.rel (%p503) target = $region40
    $region39: #{conv_stem_forward.4} parent=5 // pred_region
      %s506 = ssub.s32 %s9, 2
      // Predicated region
      $region41: #{conv_stem_forward.4} parent=39 // pred_check
        %p507 = pneg %p106
      $region42: #{conv_stem_forward.4} parent=39 // pred_check_branch
        %509 = sbr.rel (%p507) target = $region44
      $region43: #{conv_stem_forward.4} parent=39 // pred_region
        %p510 = scmp.lt.s32.totalorder %s15, 3
        %s511 = scalar_select %p510, %s15, 3
        %s512 = smul.addr %s511, 4
        %s513 = scalar_lea.vmem %s3, %s512
      $region44: #{conv_stem_forward.4} parent=39 // pred_fallthru
        _
    $region40: #{conv_stem_forward.4} parent=5 // pred_fallthru
      _
  $region6: #{conv_stem_forward.4} parent=0 // loop_footer
    %s13 = sadd.s32 1, %s9
  $region7: #{conv_stem_forward.4} parent=0 // loop_footer_branch
    %8 = sbr.rel target = $region3
  $region8: #{conv_stem_forward.4} parent=0 // loop_exit
    _

// kernel: conv_stem_forward.5
$region0: #{conv_stem_forward.5}
  #allocation0 [shape = 'u32[]', space=smem, size = 0x4, offset = 0x4, fixed_abs, tag = 'smem constant byte address 0x4 - core index']
  #allocation1 [shape = 'u32[144,128]{1,0:T(1,128)}', space=vmem, size = 0x12000, scoped, tag = 'internal scratch']
  %s0 = inlined_call_operand.vmem [shape: bf16[16,576], index: 0, kind: input, shape index: {}]
  %s1 = inlined_call_operand.vmem [shape: bf16[576,128], index: 1, kind: input, shape index: {}]
  %s2 = inlined_call_operand.vmem [shape: f32[1,128], index: 2, kind: input, shape index: {}]
  %s3 = inlined_call_operand.vmem [shape: bf16[16,128], index: 3, kind: output, shape index: {}]
  %s4 = sld [smem:[#allocation0]]
  $region45: #{conv_stem_forward.5} parent=0
    _
  %s6 = ssub.s32 1, %s4
  %s7 = scalar_select 0, %s6, %s4
  loop: start=0, step=1, limit=4
  $region2: #{conv_stem_forward.5} parent=0 // loop_pre_header
    _
  $region3: #{conv_stem_forward.5} parent=0 // loop_header
    %s9 = sphi 0, %s13
    %p10 = scmp.ge.s32.totalorder %s9, 4
    %s19 = sphi 0, %s21
    %s22 = sphi 0, %s19
    %s23 = sphi 0, %s22
    %s39 = sphi 0, %s23
    %s43 = sphi 0, %s43
    %s45 = sphi 0, %s43
    %s46 = sphi 0, %s45
    %s60 = sphi 0, %s46
    %s64 = sphi 0, %s64
    %s66 = sphi 0, %s64
    %s67 = sphi 0, %s66
    %s81 = sphi 0, %s67
    %s87 = sphi 0, %s89
    %s90 = sphi 0, %s87
    %s91 = sphi 0, %s90
    %s107 = sphi 0, %s91
  $region4: #{conv_stem_forward.5} parent=0 // loop_header_branch
    %12 = sbr.rel (%p10) target = $region8
  $region5: #{conv_stem_forward.5} parent=0 // loop_body
    %s14 = ssub.s32 %s9, 1
    %s15 = ssub.s32 %s9, 2
    %s16 = sadd.s32 %s9, 1
    %s17 = ssub.s32 %s9, %s16
    %p18 = scmp.eq.s32.totalorder %s17, 0
    %s20 = sadd.s32 %s19, 1
    %s21 = scalar_select %p18, %s19, %s20
    %p24 = pneg %p18
    %p25 = scmp.eq.s32.totalorder %s9, 1
    %p26 = por %p24, %p25
    %p27 = scmp.ne.s32.totalorder %s19, %s22
    %p28 = scmp.eq.s32.totalorder %s9, 0
    %p29 = por %p27, %p28
    %p30 = scmp.ne.s32.totalorder %s19, %s22
    %p31 = scmp.eq.s32.totalorder %s14, 1
    %p32 = por %p30, %p31
    %p33 = scmp.ne.s32.totalorder %s22, %s23
    %p34 = scmp.eq.s32.totalorder %s14, 0
    %p35 = por %p33, %p34
    %p36 = scmp.ne.s32.totalorder %s22, %s23
    %p37 = scmp.eq.s32.totalorder %s15, 1
    %p38 = por %p36, %p37
    %p40 = scmp.ne.s32.totalorder %s23, %s39
    %p41 = scmp.eq.s32.totalorder %s15, 0
    %p42 = por %p40, %p41
    %s44 = sadd.s32 %s43, 1
    %p47 = scmp.eq.s32.totalorder %s9, 1
    %p48 = scmp.ne.s32.totalorder %s43, %s45
    %p49 = scmp.eq.s32.totalorder %s9, 0
    %p50 = por %p48, %p49
    %p51 = scmp.ne.s32.totalorder %s43, %s45
    %p52 = scmp.eq.s32.totalorder %s14, 1
    %p53 = por %p51, %p52
    %p54 = scmp.ne.s32.totalorder %s45, %s46
    %p55 = scmp.eq.s32.totalorder %s14, 0
    %p56 = por %p54, %p55
    %p57 = scmp.ne.s32.totalorder %s45, %s46
    %p58 = scmp.eq.s32.totalorder %s15, 1
    %p59 = por %p57, %p58
    %p61 = scmp.ne.s32.totalorder %s46, %s60
    %p62 = scmp.eq.s32.totalorder %s15, 0
    %p63 = por %p61, %p62
    %s65 = sadd.s32 %s64, 1
    %p68 = scmp.eq.s32.totalorder %s9, 1
    %p69 = scmp.ne.s32.totalorder %s64, %s66
    %p70 = scmp.eq.s32.totalorder %s9, 0
    %p71 = por %p69, %p70
    %p72 = scmp.ne.s32.totalorder %s64, %s66
    %p73 = scmp.eq.s32.totalorder %s14, 1
    %p74 = por %p72, %p73
    %p75 = scmp.ne.s32.totalorder %s66, %s67
    %p76 = scmp.eq.s32.totalorder %s14, 0
    %p77 = por %p75, %p76
    %p78 = scmp.ne.s32.totalorder %s66, %s67
    %p79 = scmp.eq.s32.totalorder %s15, 1
    %p80 = por %p78, %p79
    %p82 = scmp.ne.s32.totalorder %s67, %s81
    %p83 = scmp.eq.s32.totalorder %s15, 0
    %p84 = por %p82, %p83
    %s85 = ssub.s32 %s9, %s16
    %p86 = scmp.eq.s32.totalorder %s85, 0
    %s88 = sadd.s32 %s87, 1
    %s89 = scalar_select %p86, %s87, %s88
    %p92 = pneg %p86
    %p93 = scmp.eq.s32.totalorder %s9, 1
    %p94 = por %p92, %p93
    %p95 = scmp.ne.s32.totalorder %s87, %s90
    %p96 = scmp.eq.s32.totalorder %s9, 0
    %p97 = por %p95, %p96
    %p98 = scmp.ne.s32.totalorder %s87, %s90
    %p99 = scmp.eq.s32.totalorder %s14, 1
    %p100 = por %p98, %p99
    %p101 = scmp.ne.s32.totalorder %s90, %s91
    %p102 = scmp.eq.s32.totalorder %s14, 0
    %p103 = por %p101, %p102
    %p104 = scmp.ne.s32.totalorder %s90, %s91
    %p105 = scmp.eq.s32.totalorder %s15, 1
    %p106 = por %p104, %p105
    %p108 = scmp.ne.s32.totalorder %s91, %s107
    %p109 = scmp.eq.s32.totalorder %s15, 0
    %p110 = por %p108, %p109
    %p111 = scmp.le.s32.totalorder 1, %s9
    %p112 = scmp.lt.s32.totalorder %s9, 3
    %p113 = pnand %p111, %p112
    %p114 = pneg %p113
    // Predicated region
    $region9: #{conv_stem_forward.5} parent=5 // pred_check
      _
    $region10: #{conv_stem_forward.5} parent=5 // pred_check_branch
      %116 = sbr.rel (%p113) target = $region12
    $region11: #{conv_stem_forward.5} parent=5 // pred_region
      %s117 = ssub.s32 %s9, 1
      // Predicated region
      $region13: #{conv_stem_forward.5} parent=11 // pred_check
        %p118 = pneg %p56
      $region14: #{conv_stem_forward.5} parent=11 // pred_check_branch
        %120 = sbr.rel (%p118) target = $region16
      $region15: #{conv_stem_forward.5} parent=11 // pred_region
        _
      $region16: #{conv_stem_forward.5} parent=11 // pred_fallthru
        _
      // Predicated region
      $region17: #{conv_stem_forward.5} parent=11 // pred_check
        %p121 = pneg %p77
      $region18: #{conv_stem_forward.5} parent=11 // pred_check_branch
        %123 = sbr.rel (%p121) target = $region20
      $region19: #{conv_stem_forward.5} parent=11 // pred_region
        _
      $region20: #{conv_stem_forward.5} parent=11 // pred_fallthru
        _
    $region12: #{conv_stem_forward.5} parent=5 // pred_fallthru
      _
    %p124 = scmp.lt.s32.totalorder %s9, 2
    // Predicated region
    $region21: #{conv_stem_forward.5} parent=5 // pred_check
      %p125 = pneg %p124
    $region22: #{conv_stem_forward.5} parent=5 // pred_check_branch
      %127 = sbr.rel (%p125) target = $region24
    $region23: #{conv_stem_forward.5} parent=5 // pred_region
      // Predicated region
      $region25: #{conv_stem_forward.5} parent=23 // pred_check
        %p128 = pneg %p29
      $region26: #{conv_stem_forward.5} parent=23 // pred_check_branch
        %130 = sbr.rel (%p128) target = $region28
      $region27: #{conv_stem_forward.5} parent=23 // pred_region
        %p131 = scmp.lt.s32.totalorder %s9, 1
        %s132 = scalar_select %p131, %s9, 1
        %s133 = smul.addr %s132, 5
        %s134 = smul.addr %s133, 4
        %s135 = scalar_lea.vmem %s0, %s134
      $region28: #{conv_stem_forward.5} parent=23 // pred_fallthru
        _
    $region24: #{conv_stem_forward.5} parent=5 // pred_fallthru
      _
    %p136 = scmp.le.s32.totalorder 1, %s9
    %p137 = scmp.lt.s32.totalorder %s9, 3
    %p138 = pnand %p136, %p137
    %p139 = pneg %p138
    // Predicated region
    $region29: #{conv_stem_forward.5} parent=5 // pred_check
      _
    $region30: #{conv_stem_forward.5} parent=5 // pred_check_branch
      %141 = sbr.rel (%p138) target = $region32
    $region31: #{conv_stem_forward.5} parent=5 // pred_region
      %s142 = ssub.s32 %s9, 1
      %p143 = scmp.lt.s32.totalorder %s14, 1
      %s144 = scalar_select %p143, %s14, 1
      %s145 = smul.addr %s144, 5
      %s146 = smul.addr %s145, 4
      %s147 = scalar_lea.vmem %s0, %s146
      %p148 = pneg %p35
      %p149 = pneg %p32
      %p150 = pneg %p56
      %p151 = pneg %p53
      %p152 = pneg %p77
      %p153 = pneg %p74
      %p154 = pneg %p103
      %p155 = pneg %p100
      %p156 = scmp.lt.s32.totalorder %s14, 1
      %s157 = scalar_select %p156, %s14, 1
      %s158 = smul.addr %s157, 4
      %s159 = scalar_lea.vmem %s3, %s158
      %p160 = scmp.lt.s32.totalorder %s14, 1
      %s161 = scalar_select %p160, %s14, 1
      %s162 = smul.addr %s161, 5
      %s163 = smul.addr %s162, 4
      %s164 = scalar_lea.vmem %s0, %s163
      %p165 = scmp.lt.s32.totalorder %s14, 1
      %s166 = scalar_select %p165, %s14, 1
      %s167 = smul.addr %s166, 4
      %s168 = scalar_lea.vmem %s3, %s167
      %v170 = vld [vmem:[%s164] sm:$0xff]
      %v171 = vld [vmem:[%s164 + $0x8] sm:$0xff]
      %v172 = vld [vmem:[%s164 + $0x10] sm:$0xf]
      %v173 = vld [vmem:[%s1] sm:$0xf]
      %v174 = vld [vmem:[%s1 + $0x4] sm:$0xf]
      %v175 = vld [vmem:[%s1 + $0x8] sm:$0xf]
      %v176 = vld [vmem:[%s1 + $0xc] sm:$0xf]
      %v177 = vld [vmem:[%s1 + $0x10] sm:$0xf]
      %v178 = vld [vmem:[%s1 + $0x14] sm:$0xf]
      %v179 = vld [vmem:[%s1 + $0x18] sm:$0xf]
      %v180 = vld [vmem:[%s1 + $0x1c] sm:$0xf]
      %v181 = vld [vmem:[%s1 + $0x20] sm:$0xf]
      %v182 = vld [vmem:[%s1 + $0x24] sm:$0xf]
      %v183 = vld [vmem:[%s1 + $0x28] sm:$0xf]
      %v184 = vld [vmem:[%s1 + $0x2c] sm:$0xf]
      %v185 = vld [vmem:[%s1 + $0x30] sm:$0xf]
      %v186 = vld [vmem:[%s1 + $0x34] sm:$0xf]
      %v187 = vld [vmem:[%s1 + $0x38] sm:$0xf]
      %v188 = vld [vmem:[%s1 + $0x3c] sm:$0xf]
      %v189 = vld [vmem:[%s1 + $0x40] sm:$0xf]
      %v190 = vld [vmem:[%s1 + $0x44] sm:$0xf]
      %v191 = vld [vmem:[%s1 + $0x48] sm:$0xf]
      %v192 = vld [vmem:[%s1 + $0x4c] sm:$0xf]
      %v193 = vld [vmem:[%s1 + $0x50] sm:$0xf]
      %v194 = vld [vmem:[%s1 + $0x54] sm:$0xf]
      %v195 = vld [vmem:[%s1 + $0x58] sm:$0xf]
      %v196 = vld [vmem:[%s1 + $0x5c] sm:$0xf]
      %v197 = vld [vmem:[%s1 + $0x60] sm:$0xf]
      %v198 = vld [vmem:[%s1 + $0x64] sm:$0xf]
      %v199 = vld [vmem:[%s1 + $0x68] sm:$0xf]
      %v200 = vld [vmem:[%s1 + $0x6c] sm:$0xf]
      %v201 = vld [vmem:[%s1 + $0x70] sm:$0xf]
      %v202 = vld [vmem:[%s1 + $0x74] sm:$0xf]
      %v203 = vld [vmem:[%s1 + $0x78] sm:$0xf]
      %v204 = vld [vmem:[%s1 + $0x7c] sm:$0xf]
      %v205 = vld [vmem:[%s1 + $0x80] sm:$0xf]
      %v206 = vld [vmem:[%s1 + $0x84] sm:$0xf]
      %v207 = vld [vmem:[%s1 + $0x88] sm:$0xf]
      %v208 = vld [vmem:[%s1 + $0x8c] sm:$0xf]
      %v209 = vld [vmem:[%s1 + $0x90] sm:$0xf]
      %v210 = vld [vmem:[%s1 + $0x94] sm:$0xf]
      %v211 = vld [vmem:[%s1 + $0x98] sm:$0xf]
      %v212 = vld [vmem:[%s1 + $0x9c] sm:$0xf]
      %v213 = vld [vmem:[%s1 + $0xa0] sm:$0xf]
      %v214 = vld [vmem:[%s1 + $0xa4] sm:$0xf]
      %v215 = vld [vmem:[%s1 + $0xa8] sm:$0xf]
      %v216 = vld [vmem:[%s1 + $0xac] sm:$0xf]
      %v217 = vld [vmem:[%s1 + $0xb0] sm:$0xf]
      %v218 = vld [vmem:[%s1 + $0xb4] sm:$0xf]
      %v219 = vld [vmem:[%s1 + $0xb8] sm:$0xf]
      %v220 = vld [vmem:[%s1 + $0xbc] sm:$0xf]
      %v221 = vld [vmem:[%s1 + $0xc0] sm:$0xf]
      %v222 = vld [vmem:[%s1 + $0xc4] sm:$0xf]
      %v223 = vld [vmem:[%s1 + $0xc8] sm:$0xf]
      %v224 = vld [vmem:[%s1 + $0xcc] sm:$0xf]
      %v225 = vld [vmem:[%s1 + $0xd0] sm:$0xf]
      %v226 = vld [vmem:[%s1 + $0xd4] sm:$0xf]
      %v227 = vld [vmem:[%s1 + $0xd8] sm:$0xf]
      %v228 = vld [vmem:[%s1 + $0xdc] sm:$0xf]
      %v229 = vld [vmem:[%s1 + $0xe0] sm:$0xf]
      %v230 = vld [vmem:[%s1 + $0xe4] sm:$0xf]
      %v231 = vld [vmem:[%s1 + $0xe8] sm:$0xf]
      %v232 = vld [vmem:[%s1 + $0xec] sm:$0xf]
      %v233 = vld [vmem:[%s1 + $0xf0] sm:$0xf]
      %v234 = vld [vmem:[%s1 + $0xf4] sm:$0xf]
      %v235 = vld [vmem:[%s1 + $0xf8] sm:$0xf]
      %v236 = vld [vmem:[%s1 + $0xfc] sm:$0xf]
      %v237 = vld [vmem:[%s1 + $0x100] sm:$0xf]
      %v238 = vld [vmem:[%s1 + $0x104] sm:$0xf]
      %v239 = vld [vmem:[%s1 + $0x108] sm:$0xf]
      %v240 = vld [vmem:[%s1 + $0x10c] sm:$0xf]
      %v241 = vld [vmem:[%s1 + $0x110] sm:$0xf]
      %v242 = vld [vmem:[%s1 + $0x114] sm:$0xf]
      %v243 = vld [vmem:[%s1 + $0x118] sm:$0xf]
      %v244 = vld [vmem:[%s1 + $0x11c] sm:$0xf]
      %v245 = vld [vmem:[%s2] sm:$0x1]
      %v247 = vlaneseq
      %v248 = vshrl.u32 %v247, 7
      %v249 = vsub.s32 0, %v248
      %v250 = vrot.slane %v245, %v249
      %v255 = vunpack.c.l.b16 %v170
      %v256 = vunpack.c.h.b16 %v170
      %v257 = vunpack.c.l.b16 %v171
      %v258 = vunpack.c.h.b16 %v171
      %v259 = vunpack.c.l.b16 %v172
      %v260 = vpack.c.b16 %v255, %v255
      %v261 = vpack.c.b16 %v256, %v256
      %v262 = vpack.c.b16 %v257, %v257
      %v263 = vpack.c.b16 %v258, %v258
      %v264 = vpack.c.b16 %v259, %v259
      %v341 = vunpack.c.l.b16 %v173
      %v342 = vunpack.c.l.b16 %v174
      %v343 = vunpack.c.l.b16 %v175
      %v344 = vunpack.c.l.b16 %v176
      %v345 = vunpack.c.l.b16 %v177
      %v346 = vunpack.c.l.b16 %v178
      %v347 = vunpack.c.l.b16 %v179
      %v348 = vunpack.c.l.b16 %v180
      %v349 = vunpack.c.l.b16 %v181
      %v350 = vunpack.c.l.b16 %v182
      %v351 = vunpack.c.l.b16 %v183
      %v352 = vunpack.c.l.b16 %v184
      %v353 = vunpack.c.l.b16 %v185
      %v354 = vunpack.c.l.b16 %v186
      %v355 = vunpack.c.l.b16 %v187
      %v356 = vunpack.c.l.b16 %v188
      %v357 = vunpack.c.l.b16 %v189
      %v358 = vunpack.c.l.b16 %v190
      %v359 = vunpack.c.l.b16 %v191
      %v360 = vunpack.c.l.b16 %v192
      %v361 = vunpack.c.l.b16 %v193
      %v362 = vunpack.c.l.b16 %v194
      %v363 = vunpack.c.l.b16 %v195
      %v364 = vunpack.c.l.b16 %v196
      %v365 = vunpack.c.l.b16 %v197
      %v366 = vunpack.c.l.b16 %v198
      %v367 = vunpack.c.l.b16 %v199
      %v368 = vunpack.c.l.b16 %v200
      %v369 = vunpack.c.l.b16 %v201
      %v370 = vunpack.c.l.b16 %v202
      %v371 = vunpack.c.l.b16 %v203
      %v372 = vunpack.c.l.b16 %v204
      %v373 = vunpack.c.l.b16 %v205
      %v374 = vunpack.c.l.b16 %v206
      %v375 = vunpack.c.l.b16 %v207
      %v376 = vunpack.c.l.b16 %v208
      %v377 = vunpack.c.l.b16 %v209
      %v378 = vunpack.c.l.b16 %v210
      %v379 = vunpack.c.l.b16 %v211
      %v380 = vunpack.c.l.b16 %v212
      %v381 = vunpack.c.l.b16 %v213
      %v382 = vunpack.c.l.b16 %v214
      %v383 = vunpack.c.l.b16 %v215
      %v384 = vunpack.c.l.b16 %v216
      %v385 = vunpack.c.l.b16 %v217
      %v386 = vunpack.c.l.b16 %v218
      %v387 = vunpack.c.l.b16 %v219
      %v388 = vunpack.c.l.b16 %v220
      %v389 = vunpack.c.l.b16 %v221
      %v390 = vunpack.c.l.b16 %v222
      %v391 = vunpack.c.l.b16 %v223
      %v392 = vunpack.c.l.b16 %v224
      %v393 = vunpack.c.l.b16 %v225
      %v394 = vunpack.c.l.b16 %v226
      %v395 = vunpack.c.l.b16 %v227
      %v396 = vunpack.c.l.b16 %v228
      %v397 = vunpack.c.l.b16 %v229
      %v398 = vunpack.c.l.b16 %v230
      %v399 = vunpack.c.l.b16 %v231
      %v400 = vunpack.c.l.b16 %v232
      %v401 = vunpack.c.l.b16 %v233
      %v402 = vunpack.c.l.b16 %v234
      %v403 = vunpack.c.l.b16 %v235
      %v404 = vunpack.c.l.b16 %v236
      %v405 = vunpack.c.l.b16 %v237
      %v406 = vunpack.c.l.b16 %v238
      %v407 = vunpack.c.l.b16 %v239
      %v408 = vunpack.c.l.b16 %v240
      %v409 = vunpack.c.l.b16 %v241
      %v410 = vunpack.c.l.b16 %v242
      %v411 = vunpack.c.l.b16 %v243
      %v412 = vunpack.c.l.b16 %v244
      %v413 = vpack.c.b16 %v342, %v341
      %v414 = vpack.c.b16 %v344, %v343
      %v415 = vpack.c.b16 %v346, %v345
      %v416 = vpack.c.b16 %v348, %v347
      %v417 = vpack.c.b16 %v350, %v349
      %v418 = vpack.c.b16 %v352, %v351
      %v419 = vpack.c.b16 %v354, %v353
      %v420 = vpack.c.b16 %v356, %v355
      %v421 = vpack.c.b16 %v358, %v357
      %v422 = vpack.c.b16 %v360, %v359
      %v423 = vpack.c.b16 %v362, %v361
      %v424 = vpack.c.b16 %v364, %v363
      %v425 = vpack.c.b16 %v366, %v365
      %v426 = vpack.c.b16 %v368, %v367
      %v427 = vpack.c.b16 %v370, %v369
      %v428 = vpack.c.b16 %v372, %v371
      %v429 = vpack.c.b16 %v374, %v373
      %v430 = vpack.c.b16 %v376, %v375
      %v431 = vpack.c.b16 %v378, %v377
      %v432 = vpack.c.b16 %v380, %v379
      %v433 = vpack.c.b16 %v382, %v381
      %v434 = vpack.c.b16 %v384, %v383
      %v435 = vpack.c.b16 %v386, %v385
      %v436 = vpack.c.b16 %v388, %v387
      %v437 = vpack.c.b16 %v390, %v389
      %v438 = vpack.c.b16 %v392, %v391
      %v439 = vpack.c.b16 %v394, %v393
      %v440 = vpack.c.b16 %v396, %v395
      %v441 = vpack.c.b16 %v398, %v397
      %v442 = vpack.c.b16 %v400, %v399
      %v443 = vpack.c.b16 %v402, %v401
      %v444 = vpack.c.b16 %v404, %v403
      %v445 = vpack.c.b16 %v406, %v405
      %v446 = vpack.c.b16 %v408, %v407
      %v447 = vpack.c.b16 %v410, %v409
      %v448 = vpack.c.b16 %v412, %v411
      %vm485 = vcmask 523264
      %v487 = vsel %vm485, %v264, 0
      %489 = vmatprep.subr.bf16.mxu0 0
      %490 = vmatpush1.bf16.msra.mxu0 %v413
      %491 = vmatprep.subr.bf16.mxu0 0
      %492 = vmatpush1.bf16.msra.mxu0 %v414
      %493 = vmatprep.subr.bf16.mxu0 0
      %494 = vmatpush1.bf16.msra.mxu0 %v415
      %495 = vmatprep.subr.bf16.mxu0 0
      %496 = vmatpush1.bf16.msra.mxu0 %v416
      %497 = vmatprep.subr.bf16.mxu0 0
      %498 = vmatpush1.bf16.msra.mxu0 %v417
      %499 = vmatprep.subr.bf16.mxu0 0
      %500 = vmatpush1.bf16.msra.mxu0 %v418
      %501 = vmatprep.subr.bf16.mxu0 0
      %502 = vmatpush1.bf16.msra.mxu0 %v419
      %503 = vmatprep.subr.bf16.mxu0 0
      %504 = vmatpush1.bf16.msra.mxu0 %v420
      %505 = vmatprep.subr.bf16.mxu0 0
      %506 = vmatpush1.bf16.msra.mxu0 %v421
      %507 = vmatprep.subr.bf16.mxu0 0
      %508 = vmatpush1.bf16.msra.mxu0 %v422
      %509 = vmatprep.subr.bf16.mxu0 0
      %510 = vmatpush1.bf16.msra.mxu0 %v423
      %511 = vmatprep.subr.bf16.mxu0 0
      %512 = vmatpush1.bf16.msra.mxu0 %v424
      %513 = vmatprep.subr.bf16.mxu0 0
      %514 = vmatpush1.bf16.msra.mxu0 %v425
      %515 = vmatprep.subr.bf16.mxu0 0
      %516 = vmatpush1.bf16.msra.mxu0 %v426
      %517 = vmatprep.subr.bf16.mxu0 0
      %518 = vmatpush1.bf16.msra.mxu0 %v427
      %519 = vmatprep.subr.bf16.mxu0 0
      %520 = vmatpush1.bf16.msra.mxu0 %v428
      %521 = vmatprep.mubr.bf16.mxu0 %v261
      %522 = vmatmul.mubr.bf16.gmra.mrb[0].mxu0 %v260
      %v523 = vpop.f32.mrb[0].mxu0
      %v524 = vadd.f32 %v250, %v523
      %v525 = vpop.f32.mrb[0].mxu0
      %v526 = vpop.f32.mrb[0].mxu0
      %v527 = vpop.f32.mrb[0].mxu0
      %528 = vdwg.mxu0
      %529 = vmatprep.subr.bf16.mxu0 0
      %530 = vmatpush1.bf16.msra.mxu0 %v429
      %531 = vmatprep.subr.bf16.mxu0 0
      %532 = vmatpush1.bf16.msra.mxu0 %v430
      %533 = vmatprep.subr.bf16.mxu0 0
      %534 = vmatpush1.bf16.msra.mxu0 %v431
      %535 = vmatprep.subr.bf16.mxu0 0
      %536 = vmatpush1.bf16.msra.mxu0 %v432
      %537 = vmatprep.subr.bf16.mxu0 0
      %538 = vmatpush1.bf16.msra.mxu0 %v433
      %539 = vmatprep.subr.bf16.mxu0 0
      %540 = vmatpush1.bf16.msra.mxu0 %v434
      %541 = vmatprep.subr.bf16.mxu0 0
      %542 = vmatpush1.bf16.msra.mxu0 %v435
      %543 = vmatprep.subr.bf16.mxu0 0
      %544 = vmatpush1.bf16.msra.mxu0 %v436
      %545 = vmatprep.subr.bf16.mxu0 0
      %546 = vmatpush1.bf16.msra.mxu0 %v437
      %547 = vmatprep.subr.bf16.mxu0 0
      %548 = vmatpush1.bf16.msra.mxu0 %v438
      %549 = vmatprep.subr.bf16.mxu0 0
      %550 = vmatpush1.bf16.msra.mxu0 %v439
      %551 = vmatprep.subr.bf16.mxu0 0
      %552 = vmatpush1.bf16.msra.mxu0 %v440
      %553 = vmatprep.subr.bf16.mxu0 0
      %554 = vmatpush1.bf16.msra.mxu0 %v441
      %555 = vmatprep.subr.bf16.mxu0 0
      %556 = vmatpush1.bf16.msra.mxu0 %v442
      %557 = vmatprep.subr.bf16.mxu0 0
      %558 = vmatpush1.bf16.msra.mxu0 %v443
      %559 = vmatprep.subr.bf16.mxu0 0
      %560 = vmatpush1.bf16.msra.mxu0 %v444
      %561 = vmatprep.mubr.bf16.mxu0 %v263
      %562 = vmatmul.mubr.bf16.gmra.mrb[0].mxu0 %v262
      %v563 = vpop.f32.mrb[0].mxu0
      %v564 = vadd.f32 %v524, %v563
      %v565 = vpop.f32.mrb[0].mxu0
      %v566 = vpop.f32.mrb[0].mxu0
      %v567 = vpop.f32.mrb[0].mxu0
      %568 = vdwg.mxu0
      %569 = vmatprep.subr.bf16.mxu0 0
      %570 = vmatpush1.bf16.msra.mxu0 %v445
      %571 = vmatprep.subr.bf16.mxu0 0
      %572 = vmatpush1.bf16.msra.mxu0 %v446
      %573 = vmatprep.subr.bf16.mxu0 0
      %574 = vmatpush1.bf16.msra.mxu0 %v447
      %575 = vmatprep.subr.bf16.mxu0 0
      %576 = vmatpush1.bf16.msra.mxu0 %v448
      %577 = vmatprep.subr.bf16.mxu0 0
      %578 = vmatpush1.bf16.msra.mxu0 0
      %579 = vmatprep.subr.bf16.mxu0 0
      %580 = vmatpush1.bf16.msra.mxu0 0
      %581 = vmatprep.subr.bf16.mxu0 0
      %582 = vmatpush1.bf16.msra.mxu0 0
      %583 = vmatprep.subr.bf16.mxu0 0
      %584 = vmatpush1.bf16.msra.mxu0 0
      %585 = vmatprep.subr.bf16.mxu0 0
      %586 = vmatpush1.bf16.msra.mxu0 0
      %587 = vmatprep.subr.bf16.mxu0 0
      %588 = vmatpush1.bf16.msra.mxu0 0
      %589 = vmatprep.subr.bf16.mxu0 0
      %590 = vmatpush1.bf16.msra.mxu0 0
      %591 = vmatprep.subr.bf16.mxu0 0
      %592 = vmatpush1.bf16.msra.mxu0 0
      %593 = vmatprep.subr.bf16.mxu0 0
      %594 = vmatpush1.bf16.msra.mxu0 0
      %595 = vmatprep.subr.bf16.mxu0 0
      %596 = vmatpush1.bf16.msra.mxu0 0
      %597 = vmatprep.subr.bf16.mxu0 0
      %598 = vmatpush1.bf16.msra.mxu0 0
      %599 = vmatprep.subr.bf16.mxu0 0
      %600 = vmatpush1.bf16.msra.mxu0 0
      %601 = vmatprep.mubr.bf16.mxu0 0
      %602 = vmatmul.mubr.bf16.gmra.mrb[0].mxu0 %v487
      %v603 = vpop.f32.mrb[0].mxu0
      %v604 = vadd.f32 %v564, %v603
      %v605 = vpop.f32.mrb[0].mxu0
      %v606 = vpop.f32.mrb[0].mxu0
      %v607 = vpop.f32.mrb[0].mxu0
      %608 = vdwg.mxu0
      %v609 = vmax.f32 %v604, 0.0
      %v610 = vpack.c.bf16 %v609, %v609
      %611 = vst [vmem:[%s168] sm:$0xf] %v610
      %p612 = scmp.lt.s32.totalorder %s14, 1
      %s613 = scalar_select %p612, %s14, 1
      %s614 = smul.addr %s613, 4
      %s615 = scalar_lea.vmem %s3, %s614
      // Predicated region
      $region33: #{conv_stem_forward.5} parent=31 // pred_check
        %p616 = pneg %p100
      $region34: #{conv_stem_forward.5} parent=31 // pred_check_branch
        %618 = sbr.rel (%p616) target = $region36
      $region35: #{conv_stem_forward.5} parent=31 // pred_region
        _
      $region36: #{conv_stem_forward.5} parent=31 // pred_fallthru
        _
    $region32: #{conv_stem_forward.5} parent=5 // pred_fallthru
      _
    %p619 = scmp.le.s32.totalorder 2, %s9
    // Predicated region
    $region37: #{conv_stem_forward.5} parent=5 // pred_check
      %p620 = pneg %p619
    $region38: #{conv_stem_forward.5} parent=5 // pred_check_branch
      %622 = sbr.rel (%p620) target = $region40
    $region39: #{conv_stem_forward.5} parent=5 // pred_region
      %s623 = ssub.s32 %s9, 2
      // Predicated region
      $region41: #{conv_stem_forward.5} parent=39 // pred_check
        %p624 = pneg %p106
      $region42: #{conv_stem_forward.5} parent=39 // pred_check_branch
        %626 = sbr.rel (%p624) target = $region44
      $region43: #{conv_stem_forward.5} parent=39 // pred_region
        %p627 = scmp.lt.s32.totalorder %s15, 1
        %s628 = scalar_select %p627, %s15, 1
        %s629 = smul.addr %s628, 4
        %s630 = scalar_lea.vmem %s3, %s629
      $region44: #{conv_stem_forward.5} parent=39 // pred_fallthru
        _
    $region40: #{conv_stem_forward.5} parent=5 // pred_fallthru
      _
  $region6: #{conv_stem_forward.5} parent=0 // loop_footer
    %s13 = sadd.s32 1, %s9
  $region7: #{conv_stem_forward.5} parent=0 // loop_footer_branch
    %8 = sbr.rel target = $region3
  $region8: #{conv_stem_forward.5} parent=0 // loop_exit
    _

// kernel: conv_stem_forward.6
$region0: #{conv_stem_forward.6}
  #allocation0 [shape = 'u32[]', space=smem, size = 0x4, offset = 0x4, fixed_abs, tag = 'smem constant byte address 0x4 - core index']
  #allocation1 [shape = 'u32[144,128]{1,0:T(1,128)}', space=vmem, size = 0x12000, scoped, tag = 'internal scratch']
  %s0 = inlined_call_operand.vmem [shape: bf16[8,576], index: 0, kind: input, shape index: {}]
  %s1 = inlined_call_operand.vmem [shape: bf16[576,128], index: 1, kind: input, shape index: {}]
  %s2 = inlined_call_operand.vmem [shape: f32[1,128], index: 2, kind: input, shape index: {}]
  %s3 = inlined_call_operand.vmem [shape: bf16[8,128], index: 3, kind: output, shape index: {}]
  %s4 = sld [smem:[#allocation0]]
  $region22: #{conv_stem_forward.6} parent=0
    _
  %s6 = ssub.s32 1, %s4
  %s7 = scalar_select 0, %s6, %s4
  // Predicated region
  $region2: #{conv_stem_forward.6} parent=0 // pred_check
    _
  $region3: #{conv_stem_forward.6} parent=0 // pred_check_branch
    %9 = sbr.rel (0) target = $region5
  $region4: #{conv_stem_forward.6} parent=0 // pred_region
    _
  $region5: #{conv_stem_forward.6} parent=0 // pred_fallthru
    _
  // Predicated region
  $region6: #{conv_stem_forward.6} parent=0 // pred_check
    _
  $region7: #{conv_stem_forward.6} parent=0 // pred_check_branch
    %11 = sbr.rel (0) target = $region9
  $region8: #{conv_stem_forward.6} parent=0 // pred_region
    _
  $region9: #{conv_stem_forward.6} parent=0 // pred_fallthru
    _
  // Predicated region
  $region10: #{conv_stem_forward.6} parent=0 // pred_check
    _
  $region11: #{conv_stem_forward.6} parent=0 // pred_check_branch
    %13 = sbr.rel (0) target = $region13
  $region12: #{conv_stem_forward.6} parent=0 // pred_region
    _
  $region13: #{conv_stem_forward.6} parent=0 // pred_fallthru
    _
  %v15 = vld [vmem:[%s0] sm:$0xff]
  %v16 = vld [vmem:[%s0 + $0x8] sm:$0xff]
  %v17 = vld [vmem:[%s0 + $0x10] sm:$0xf]
  %v18 = vld [vmem:[%s1] sm:$0xf]
  %v19 = vld [vmem:[%s1 + $0x4] sm:$0xf]
  %v20 = vld [vmem:[%s1 + $0x8] sm:$0xf]
  %v21 = vld [vmem:[%s1 + $0xc] sm:$0xf]
  %v22 = vld [vmem:[%s1 + $0x10] sm:$0xf]
  %v23 = vld [vmem:[%s1 + $0x14] sm:$0xf]
  %v24 = vld [vmem:[%s1 + $0x18] sm:$0xf]
  %v25 = vld [vmem:[%s1 + $0x1c] sm:$0xf]
  %v26 = vld [vmem:[%s1 + $0x20] sm:$0xf]
  %v27 = vld [vmem:[%s1 + $0x24] sm:$0xf]
  %v28 = vld [vmem:[%s1 + $0x28] sm:$0xf]
  %v29 = vld [vmem:[%s1 + $0x2c] sm:$0xf]
  %v30 = vld [vmem:[%s1 + $0x30] sm:$0xf]
  %v31 = vld [vmem:[%s1 + $0x34] sm:$0xf]
  %v32 = vld [vmem:[%s1 + $0x38] sm:$0xf]
  %v33 = vld [vmem:[%s1 + $0x3c] sm:$0xf]
  %v34 = vld [vmem:[%s1 + $0x40] sm:$0xf]
  %v35 = vld [vmem:[%s1 + $0x44] sm:$0xf]
  %v36 = vld [vmem:[%s1 + $0x48] sm:$0xf]
  %v37 = vld [vmem:[%s1 + $0x4c] sm:$0xf]
  %v38 = vld [vmem:[%s1 + $0x50] sm:$0xf]
  %v39 = vld [vmem:[%s1 + $0x54] sm:$0xf]
  %v40 = vld [vmem:[%s1 + $0x58] sm:$0xf]
  %v41 = vld [vmem:[%s1 + $0x5c] sm:$0xf]
  %v42 = vld [vmem:[%s1 + $0x60] sm:$0xf]
  %v43 = vld [vmem:[%s1 + $0x64] sm:$0xf]
  %v44 = vld [vmem:[%s1 + $0x68] sm:$0xf]
  %v45 = vld [vmem:[%s1 + $0x6c] sm:$0xf]
  %v46 = vld [vmem:[%s1 + $0x70] sm:$0xf]
  %v47 = vld [vmem:[%s1 + $0x74] sm:$0xf]
  %v48 = vld [vmem:[%s1 + $0x78] sm:$0xf]
  %v49 = vld [vmem:[%s1 + $0x7c] sm:$0xf]
  %v50 = vld [vmem:[%s1 + $0x80] sm:$0xf]
  %v51 = vld [vmem:[%s1 + $0x84] sm:$0xf]
  %v52 = vld [vmem:[%s1 + $0x88] sm:$0xf]
  %v53 = vld [vmem:[%s1 + $0x8c] sm:$0xf]
  %v54 = vld [vmem:[%s1 + $0x90] sm:$0xf]
  %v55 = vld [vmem:[%s1 + $0x94] sm:$0xf]
  %v56 = vld [vmem:[%s1 + $0x98] sm:$0xf]
  %v57 = vld [vmem:[%s1 + $0x9c] sm:$0xf]
  %v58 = vld [vmem:[%s1 + $0xa0] sm:$0xf]
  %v59 = vld [vmem:[%s1 + $0xa4] sm:$0xf]
  %v60 = vld [vmem:[%s1 + $0xa8] sm:$0xf]
  %v61 = vld [vmem:[%s1 + $0xac] sm:$0xf]
  %v62 = vld [vmem:[%s1 + $0xb0] sm:$0xf]
  %v63 = vld [vmem:[%s1 + $0xb4] sm:$0xf]
  %v64 = vld [vmem:[%s1 + $0xb8] sm:$0xf]
  %v65 = vld [vmem:[%s1 + $0xbc] sm:$0xf]
  %v66 = vld [vmem:[%s1 + $0xc0] sm:$0xf]
  %v67 = vld [vmem:[%s1 + $0xc4] sm:$0xf]
  %v68 = vld [vmem:[%s1 + $0xc8] sm:$0xf]
  %v69 = vld [vmem:[%s1 + $0xcc] sm:$0xf]
  %v70 = vld [vmem:[%s1 + $0xd0] sm:$0xf]
  %v71 = vld [vmem:[%s1 + $0xd4] sm:$0xf]
  %v72 = vld [vmem:[%s1 + $0xd8] sm:$0xf]
  %v73 = vld [vmem:[%s1 + $0xdc] sm:$0xf]
  %v74 = vld [vmem:[%s1 + $0xe0] sm:$0xf]
  %v75 = vld [vmem:[%s1 + $0xe4] sm:$0xf]
  %v76 = vld [vmem:[%s1 + $0xe8] sm:$0xf]
  %v77 = vld [vmem:[%s1 + $0xec] sm:$0xf]
  %v78 = vld [vmem:[%s1 + $0xf0] sm:$0xf]
  %v79 = vld [vmem:[%s1 + $0xf4] sm:$0xf]
  %v80 = vld [vmem:[%s1 + $0xf8] sm:$0xf]
  %v81 = vld [vmem:[%s1 + $0xfc] sm:$0xf]
  %v82 = vld [vmem:[%s1 + $0x100] sm:$0xf]
  %v83 = vld [vmem:[%s1 + $0x104] sm:$0xf]
  %v84 = vld [vmem:[%s1 + $0x108] sm:$0xf]
  %v85 = vld [vmem:[%s1 + $0x10c] sm:$0xf]
  %v86 = vld [vmem:[%s1 + $0x110] sm:$0xf]
  %v87 = vld [vmem:[%s1 + $0x114] sm:$0xf]
  %v88 = vld [vmem:[%s1 + $0x118] sm:$0xf]
  %v89 = vld [vmem:[%s1 + $0x11c] sm:$0xf]
  %v90 = vld [vmem:[%s2] sm:$0x1]
  %v92 = vlaneseq
  %v93 = vshrl.u32 %v92, 7
  %v94 = vsub.s32 0, %v93
  %v95 = vrot.slane %v90, %v94
  %v100 = vunpack.c.l.b16 %v15
  %v101 = vunpack.c.h.b16 %v15
  %v102 = vunpack.c.l.b16 %v16
  %v103 = vunpack.c.h.b16 %v16
  %v104 = vunpack.c.l.b16 %v17
  %v105 = vpack.c.b16 %v100, %v100
  %v106 = vpack.c.b16 %v101, %v101
  %v107 = vpack.c.b16 %v102, %v102
  %v108 = vpack.c.b16 %v103, %v103
  %v109 = vpack.c.b16 %v104, %v104
  %v186 = vunpack.c.l.b16 %v18
  %v187 = vunpack.c.l.b16 %v19
  %v188 = vunpack.c.l.b16 %v20
  %v189 = vunpack.c.l.b16 %v21
  %v190 = vunpack.c.l.b16 %v22
  %v191 = vunpack.c.l.b16 %v23
  %v192 = vunpack.c.l.b16 %v24
  %v193 = vunpack.c.l.b16 %v25
  %v194 = vunpack.c.l.b16 %v26
  %v195 = vunpack.c.l.b16 %v27
  %v196 = vunpack.c.l.b16 %v28
  %v197 = vunpack.c.l.b16 %v29
  %v198 = vunpack.c.l.b16 %v30
  %v199 = vunpack.c.l.b16 %v31
  %v200 = vunpack.c.l.b16 %v32
  %v201 = vunpack.c.l.b16 %v33
  %v202 = vunpack.c.l.b16 %v34
  %v203 = vunpack.c.l.b16 %v35
  %v204 = vunpack.c.l.b16 %v36
  %v205 = vunpack.c.l.b16 %v37
  %v206 = vunpack.c.l.b16 %v38
  %v207 = vunpack.c.l.b16 %v39
  %v208 = vunpack.c.l.b16 %v40
  %v209 = vunpack.c.l.b16 %v41
  %v210 = vunpack.c.l.b16 %v42
  %v211 = vunpack.c.l.b16 %v43
  %v212 = vunpack.c.l.b16 %v44
  %v213 = vunpack.c.l.b16 %v45
  %v214 = vunpack.c.l.b16 %v46
  %v215 = vunpack.c.l.b16 %v47
  %v216 = vunpack.c.l.b16 %v48
  %v217 = vunpack.c.l.b16 %v49
  %v218 = vunpack.c.l.b16 %v50
  %v219 = vunpack.c.l.b16 %v51
  %v220 = vunpack.c.l.b16 %v52
  %v221 = vunpack.c.l.b16 %v53
  %v222 = vunpack.c.l.b16 %v54
  %v223 = vunpack.c.l.b16 %v55
  %v224 = vunpack.c.l.b16 %v56
  %v225 = vunpack.c.l.b16 %v57
  %v226 = vunpack.c.l.b16 %v58
  %v227 = vunpack.c.l.b16 %v59
  %v228 = vunpack.c.l.b16 %v60
  %v229 = vunpack.c.l.b16 %v61
  %v230 = vunpack.c.l.b16 %v62
  %v231 = vunpack.c.l.b16 %v63
  %v232 = vunpack.c.l.b16 %v64
  %v233 = vunpack.c.l.b16 %v65
  %v234 = vunpack.c.l.b16 %v66
  %v235 = vunpack.c.l.b16 %v67
  %v236 = vunpack.c.l.b16 %v68
  %v237 = vunpack.c.l.b16 %v69
  %v238 = vunpack.c.l.b16 %v70
  %v239 = vunpack.c.l.b16 %v71
  %v240 = vunpack.c.l.b16 %v72
  %v241 = vunpack.c.l.b16 %v73
  %v242 = vunpack.c.l.b16 %v74
  %v243 = vunpack.c.l.b16 %v75
  %v244 = vunpack.c.l.b16 %v76
  %v245 = vunpack.c.l.b16 %v77
  %v246 = vunpack.c.l.b16 %v78
  %v247 = vunpack.c.l.b16 %v79
  %v248 = vunpack.c.l.b16 %v80
  %v249 = vunpack.c.l.b16 %v81
  %v250 = vunpack.c.l.b16 %v82
  %v251 = vunpack.c.l.b16 %v83
  %v252 = vunpack.c.l.b16 %v84
  %v253 = vunpack.c.l.b16 %v85
  %v254 = vunpack.c.l.b16 %v86
  %v255 = vunpack.c.l.b16 %v87
  %v256 = vunpack.c.l.b16 %v88
  %v257 = vunpack.c.l.b16 %v89
  %v258 = vpack.c.b16 %v187, %v186
  %v259 = vpack.c.b16 %v189, %v188
  %v260 = vpack.c.b16 %v191, %v190
  %v261 = vpack.c.b16 %v193, %v192
  %v262 = vpack.c.b16 %v195, %v194
  %v263 = vpack.c.b16 %v197, %v196
  %v264 = vpack.c.b16 %v199, %v198
  %v265 = vpack.c.b16 %v201, %v200
  %v266 = vpack.c.b16 %v203, %v202
  %v267 = vpack.c.b16 %v205, %v204
  %v268 = vpack.c.b16 %v207, %v206
  %v269 = vpack.c.b16 %v209, %v208
  %v270 = vpack.c.b16 %v211, %v210
  %v271 = vpack.c.b16 %v213, %v212
  %v272 = vpack.c.b16 %v215, %v214
  %v273 = vpack.c.b16 %v217, %v216
  %v274 = vpack.c.b16 %v219, %v218
  %v275 = vpack.c.b16 %v221, %v220
  %v276 = vpack.c.b16 %v223, %v222
  %v277 = vpack.c.b16 %v225, %v224
  %v278 = vpack.c.b16 %v227, %v226
  %v279 = vpack.c.b16 %v229, %v228
  %v280 = vpack.c.b16 %v231, %v230
  %v281 = vpack.c.b16 %v233, %v232
  %v282 = vpack.c.b16 %v235, %v234
  %v283 = vpack.c.b16 %v237, %v236
  %v284 = vpack.c.b16 %v239, %v238
  %v285 = vpack.c.b16 %v241, %v240
  %v286 = vpack.c.b16 %v243, %v242
  %v287 = vpack.c.b16 %v245, %v244
  %v288 = vpack.c.b16 %v247, %v246
  %v289 = vpack.c.b16 %v249, %v248
  %v290 = vpack.c.b16 %v251, %v250
  %v291 = vpack.c.b16 %v253, %v252
  %v292 = vpack.c.b16 %v255, %v254
  %v293 = vpack.c.b16 %v257, %v256
  %vm330 = vcmask 523264
  %v332 = vsel %vm330, %v109, 0
  %334 = vmatprep.subr.bf16.mxu0 0
  %335 = vmatpush1.bf16.msra.mxu0 %v258
  %336 = vmatprep.subr.bf16.mxu0 0
  %337 = vmatpush1.bf16.msra.mxu0 %v259
  %338 = vmatprep.subr.bf16.mxu0 0
  %339 = vmatpush1.bf16.msra.mxu0 %v260
  %340 = vmatprep.subr.bf16.mxu0 0
  %341 = vmatpush1.bf16.msra.mxu0 %v261
  %342 = vmatprep.subr.bf16.mxu0 0
  %343 = vmatpush1.bf16.msra.mxu0 %v262
  %344 = vmatprep.subr.bf16.mxu0 0
  %345 = vmatpush1.bf16.msra.mxu0 %v263
  %346 = vmatprep.subr.bf16.mxu0 0
  %347 = vmatpush1.bf16.msra.mxu0 %v264
  %348 = vmatprep.subr.bf16.mxu0 0
  %349 = vmatpush1.bf16.msra.mxu0 %v265
  %350 = vmatprep.subr.bf16.mxu0 0
  %351 = vmatpush1.bf16.msra.mxu0 %v266
  %352 = vmatprep.subr.bf16.mxu0 0
  %353 = vmatpush1.bf16.msra.mxu0 %v267
  %354 = vmatprep.subr.bf16.mxu0 0
  %355 = vmatpush1.bf16.msra.mxu0 %v268
  %356 = vmatprep.subr.bf16.mxu0 0
  %357 = vmatpush1.bf16.msra.mxu0 %v269
  %358 = vmatprep.subr.bf16.mxu0 0
  %359 = vmatpush1.bf16.msra.mxu0 %v270
  %360 = vmatprep.subr.bf16.mxu0 0
  %361 = vmatpush1.bf16.msra.mxu0 %v271
  %362 = vmatprep.subr.bf16.mxu0 0
  %363 = vmatpush1.bf16.msra.mxu0 %v272
  %364 = vmatprep.subr.bf16.mxu0 0
  %365 = vmatpush1.bf16.msra.mxu0 %v273
  %366 = vmatprep.mubr.bf16.mxu0 %v106
  %367 = vmatmul.mubr.bf16.gmra.mrb[0].mxu0 %v105
  %v368 = vpop.f32.mrb[0].mxu0
  %v369 = vadd.f32 %v95, %v368
  %v370 = vpop.f32.mrb[0].mxu0
  %v371 = vpop.f32.mrb[0].mxu0
  %v372 = vpop.f32.mrb[0].mxu0
  %373 = vdwg.mxu0
  %374 = vmatprep.subr.bf16.mxu0 0
  %375 = vmatpush1.bf16.msra.mxu0 %v274
  %376 = vmatprep.subr.bf16.mxu0 0
  %377 = vmatpush1.bf16.msra.mxu0 %v275
  %378 = vmatprep.subr.bf16.mxu0 0
  %379 = vmatpush1.bf16.msra.mxu0 %v276
  %380 = vmatprep.subr.bf16.mxu0 0
  %381 = vmatpush1.bf16.msra.mxu0 %v277
  %382 = vmatprep.subr.bf16.mxu0 0
  %383 = vmatpush1.bf16.msra.mxu0 %v278
  %384 = vmatprep.subr.bf16.mxu0 0
  %385 = vmatpush1.bf16.msra.mxu0 %v279
  %386 = vmatprep.subr.bf16.mxu0 0
  %387 = vmatpush1.bf16.msra.mxu0 %v280
  %388 = vmatprep.subr.bf16.mxu0 0
  %389 = vmatpush1.bf16.msra.mxu0 %v281
  %390 = vmatprep.subr.bf16.mxu0 0
  %391 = vmatpush1.bf16.msra.mxu0 %v282
  %392 = vmatprep.subr.bf16.mxu0 0
  %393 = vmatpush1.bf16.msra.mxu0 %v283
  %394 = vmatprep.subr.bf16.mxu0 0
  %395 = vmatpush1.bf16.msra.mxu0 %v284
  %396 = vmatprep.subr.bf16.mxu0 0
  %397 = vmatpush1.bf16.msra.mxu0 %v285
  %398 = vmatprep.subr.bf16.mxu0 0
  %399 = vmatpush1.bf16.msra.mxu0 %v286
  %400 = vmatprep.subr.bf16.mxu0 0
  %401 = vmatpush1.bf16.msra.mxu0 %v287
  %402 = vmatprep.subr.bf16.mxu0 0
  %403 = vmatpush1.bf16.msra.mxu0 %v288
  %404 = vmatprep.subr.bf16.mxu0 0
  %405 = vmatpush1.bf16.msra.mxu0 %v289
  %406 = vmatprep.mubr.bf16.mxu0 %v108
  %407 = vmatmul.mubr.bf16.gmra.mrb[0].mxu0 %v107
  %v408 = vpop.f32.mrb[0].mxu0
  %v409 = vadd.f32 %v369, %v408
  %v410 = vpop.f32.mrb[0].mxu0
  %v411 = vpop.f32.mrb[0].mxu0
  %v412 = vpop.f32.mrb[0].mxu0
  %413 = vdwg.mxu0
  %414 = vmatprep.subr.bf16.mxu0 0
  %415 = vmatpush1.bf16.msra.mxu0 %v290
  %416 = vmatprep.subr.bf16.mxu0 0
  %417 = vmatpush1.bf16.msra.mxu0 %v291
  %418 = vmatprep.subr.bf16.mxu0 0
  %419 = vmatpush1.bf16.msra.mxu0 %v292
  %420 = vmatprep.subr.bf16.mxu0 0
  %421 = vmatpush1.bf16.msra.mxu0 %v293
  %422 = vmatprep.subr.bf16.mxu0 0
  %423 = vmatpush1.bf16.msra.mxu0 0
  %424 = vmatprep.subr.bf16.mxu0 0
  %425 = vmatpush1.bf16.msra.mxu0 0
  %426 = vmatprep.subr.bf16.mxu0 0
  %427 = vmatpush1.bf16.msra.mxu0 0
  %428 = vmatprep.subr.bf16.mxu0 0
  %429 = vmatpush1.bf16.msra.mxu0 0
  %430 = vmatprep.subr.bf16.mxu0 0
  %431 = vmatpush1.bf16.msra.mxu0 0
  %432 = vmatprep.subr.bf16.mxu0 0
  %433 = vmatpush1.bf16.msra.mxu0 0
  %434 = vmatprep.subr.bf16.mxu0 0
  %435 = vmatpush1.bf16.msra.mxu0 0
  %436 = vmatprep.subr.bf16.mxu0 0
  %437 = vmatpush1.bf16.msra.mxu0 0
  %438 = vmatprep.subr.bf16.mxu0 0
  %439 = vmatpush1.bf16.msra.mxu0 0
  %440 = vmatprep.subr.bf16.mxu0 0
  %441 = vmatpush1.bf16.msra.mxu0 0
  %442 = vmatprep.subr.bf16.mxu0 0
  %443 = vmatpush1.bf16.msra.mxu0 0
  %444 = vmatprep.subr.bf16.mxu0 0
  %445 = vmatpush1.bf16.msra.mxu0 0
  %446 = vmatprep.mubr.bf16.mxu0 0
  %447 = vmatmul.mubr.bf16.gmra.mrb[0].mxu0 %v332
  %v448 = vpop.f32.mrb[0].mxu0
  %v449 = vadd.f32 %v409, %v448
  %v450 = vpop.f32.mrb[0].mxu0
  %v451 = vpop.f32.mrb[0].mxu0
  %v452 = vpop.f32.mrb[0].mxu0
  %453 = vdwg.mxu0
  %v454 = vmax.f32 %v449, 0.0
  %v455 = vpack.c.bf16 %v454, %v454
  %456 = vst [vmem:[%s3] sm:$0xf] %v455
  // Predicated region
  $region14: #{conv_stem_forward.6} parent=0 // pred_check
    _
  $region15: #{conv_stem_forward.6} parent=0 // pred_check_branch
    %458 = sbr.rel (0) target = $region17
  $region16: #{conv_stem_forward.6} parent=0 // pred_region
    _
  $region17: #{conv_stem_forward.6} parent=0 // pred_fallthru
    _
  // Predicated region
  $region18: #{conv_stem_forward.6} parent=0 // pred_check
    _
  $region19: #{conv_stem_forward.6} parent=0 // pred_check_branch
    %460 = sbr.rel (0) target = $region21
  $region20: #{conv_stem_forward.6} parent=0 // pred_region
    _
  $region21: #{conv_stem_forward.6} parent=0 // pred_fallthru
    _

// kernel: conv_stem_forward.7
$region0: #{conv_stem_forward.7}
  #allocation0 [shape = 'u32[]', space=smem, size = 0x4, offset = 0x4, fixed_abs, tag = 'smem constant byte address 0x4 - core index']
  #allocation1 [shape = 'u32[144,128]{1,0:T(1,128)}', space=vmem, size = 0x12000, scoped, tag = 'internal scratch']
  %s0 = inlined_call_operand.vmem [shape: bf16[8,288], index: 0, kind: input, shape index: {}]
  %s1 = inlined_call_operand.vmem [shape: bf16[288,64], index: 1, kind: input, shape index: {}]
  %s2 = inlined_call_operand.vmem [shape: f32[1,64], index: 2, kind: input, shape index: {}]
  %s3 = inlined_call_operand.vmem [shape: bf16[64,64], index: 3, kind: input, shape index: {}]
  %s4 = inlined_call_operand.vmem [shape: f32[1,64], index: 4, kind: input, shape index: {}]
  %s5 = inlined_call_operand.hbm [shape: bf16[8,64], index: 5, kind: output, shape index: {}]
  %s6 = sld [smem:[#allocation0]]
  $region30: #{conv_stem_forward.7} parent=0
    _
  %s8 = ssub.s32 1, %s6
  %s9 = scalar_select 0, %s8, %s6
  $region1: #{conv_stem_forward.7} parent=0
    #allocation2 [shape = 'u8[2048]{0}', space=vmem, size = 0x800, scoped, tag = 'output window, operand 0, single buffered']
    #allocation3 [shape = 's32[1]{0}', space=sflag, size = 0x4, scoped, tag = 'scoped memory for conv_stem_forward.7']
    %10 = vsyncpa [#allocation3], 0
    // Predicated region
    $region2: #{conv_stem_forward.7} parent=1 // pred_check
      _
    $region3: #{conv_stem_forward.7} parent=1 // pred_check_branch
      %12 = sbr.rel (0) target = $region5
    $region4: #{conv_stem_forward.7} parent=1 // pred_region
      _
    $region5: #{conv_stem_forward.7} parent=1 // pred_fallthru
      _
    // Predicated region
    $region6: #{conv_stem_forward.7} parent=1 // pred_check
      _
    $region7: #{conv_stem_forward.7} parent=1 // pred_check_branch
      %14 = sbr.rel (0) target = $region9
    $region8: #{conv_stem_forward.7} parent=1 // pred_region
      _
    $region9: #{conv_stem_forward.7} parent=1 // pred_fallthru
      _
    // Predicated region
    $region10: #{conv_stem_forward.7} parent=1 // pred_check
      _
    $region11: #{conv_stem_forward.7} parent=1 // pred_check_branch
      %16 = sbr.rel (0) target = $region13
    $region12: #{conv_stem_forward.7} parent=1 // pred_region
      _
    $region13: #{conv_stem_forward.7} parent=1 // pred_fallthru
      _
    // Predicated region
    $region14: #{conv_stem_forward.7} parent=1 // pred_check
      _
    $region15: #{conv_stem_forward.7} parent=1 // pred_check_branch
      %18 = sbr.rel (0) target = $region17
    $region16: #{conv_stem_forward.7} parent=1 // pred_region
      _
    $region17: #{conv_stem_forward.7} parent=1 // pred_fallthru
      _
    // Predicated region
    $region18: #{conv_stem_forward.7} parent=1 // pred_check
      _
    $region19: #{conv_stem_forward.7} parent=1 // pred_check_branch
      %20 = sbr.rel (0) target = $region21
    $region20: #{conv_stem_forward.7} parent=1 // pred_region
      _
    $region21: #{conv_stem_forward.7} parent=1 // pred_fallthru
      _
    %v22 = vld [vmem:[%s0] sm:$0xff]
    %v23 = vld [vmem:[%s0 + $0x8] sm:$0xf]
    %v24 = vld [vmem:[%s1] sm:$0xf]
    %v25 = vld [vmem:[%s1 + $0x4] sm:$0xf]
    %v26 = vld [vmem:[%s1 + $0x8] sm:$0xf]
    %v27 = vld [vmem:[%s1 + $0xc] sm:$0xf]
    %v28 = vld [vmem:[%s1 + $0x10] sm:$0xf]
    %v29 = vld [vmem:[%s1 + $0x14] sm:$0xf]
    %v30 = vld [vmem:[%s1 + $0x18] sm:$0xf]
    %v31 = vld [vmem:[%s1 + $0x1c] sm:$0xf]
    %v32 = vld [vmem:[%s1 + $0x20] sm:$0xf]
    %v33 = vld [vmem:[%s1 + $0x24] sm:$0xf]
    %v34 = vld [vmem:[%s1 + $0x28] sm:$0xf]
    %v35 = vld [vmem:[%s1 + $0x2c] sm:$0xf]
    %v36 = vld [vmem:[%s1 + $0x30] sm:$0xf]
    %v37 = vld [vmem:[%s1 + $0x34] sm:$0xf]
    %v38 = vld [vmem:[%s1 + $0x38] sm:$0xf]
    %v39 = vld [vmem:[%s1 + $0x3c] sm:$0xf]
    %v40 = vld [vmem:[%s1 + $0x40] sm:$0xf]
    %v41 = vld [vmem:[%s1 + $0x44] sm:$0xf]
    %v42 = vld [vmem:[%s1 + $0x48] sm:$0xf]
    %v43 = vld [vmem:[%s1 + $0x4c] sm:$0xf]
    %v44 = vld [vmem:[%s1 + $0x50] sm:$0xf]
    %v45 = vld [vmem:[%s1 + $0x54] sm:$0xf]
    %v46 = vld [vmem:[%s1 + $0x58] sm:$0xf]
    %v47 = vld [vmem:[%s1 + $0x5c] sm:$0xf]
    %v48 = vld [vmem:[%s1 + $0x60] sm:$0xf]
    %v49 = vld [vmem:[%s1 + $0x64] sm:$0xf]
    %v50 = vld [vmem:[%s1 + $0x68] sm:$0xf]
    %v51 = vld [vmem:[%s1 + $0x6c] sm:$0xf]
    %v52 = vld [vmem:[%s1 + $0x70] sm:$0xf]
    %v53 = vld [vmem:[%s1 + $0x74] sm:$0xf]
    %v54 = vld [vmem:[%s1 + $0x78] sm:$0xf]
    %v55 = vld [vmem:[%s1 + $0x7c] sm:$0xf]
    %v56 = vld [vmem:[%s1 + $0x80] sm:$0xf]
    %v57 = vld [vmem:[%s1 + $0x84] sm:$0xf]
    %v58 = vld [vmem:[%s1 + $0x88] sm:$0xf]
    %v59 = vld [vmem:[%s1 + $0x8c] sm:$0xf]
    %v60 = vld [vmem:[%s2] sm:$0x1]
    %v62 = vlaneseq
    %v63 = vshrl.u32 %v62, 7
    %v64 = vsub.s32 0, %v63
    %v65 = vrot.slane %v60, %v64
    %v69 = vunpack.c.l.b16 %v22
    %v70 = vunpack.c.h.b16 %v22
    %v71 = vunpack.c.l.b16 %v23
    %v72 = vpack.c.b16 %v69, %v69
    %v73 = vpack.c.b16 %v70, %v70
    %v74 = vpack.c.b16 %v71, %v71
    %v113 = vunpack.c.l.b16 %v24
    %v114 = vunpack.c.l.b16 %v25
    %v115 = vunpack.c.l.b16 %v26
    %v116 = vunpack.c.l.b16 %v27
    %v117 = vunpack.c.l.b16 %v28
    %v118 = vunpack.c.l.b16 %v29
    %v119 = vunpack.c.l.b16 %v30
    %v120 = vunpack.c.l.b16 %v31
    %v121 = vunpack.c.l.b16 %v32
    %v122 = vunpack.c.l.b16 %v33
    %v123 = vunpack.c.l.b16 %v34
    %v124 = vunpack.c.l.b16 %v35
    %v125 = vunpack.c.l.b16 %v36
    %v126 = vunpack.c.l.b16 %v37
    %v127 = vunpack.c.l.b16 %v38
    %v128 = vunpack.c.l.b16 %v39
    %v129 = vunpack.c.l.b16 %v40
    %v130 = vunpack.c.l.b16 %v41
    %v131 = vunpack.c.l.b16 %v42
    %v132 = vunpack.c.l.b16 %v43
    %v133 = vunpack.c.l.b16 %v44
    %v134 = vunpack.c.l.b16 %v45
    %v135 = vunpack.c.l.b16 %v46
    %v136 = vunpack.c.l.b16 %v47
    %v137 = vunpack.c.l.b16 %v48
    %v138 = vunpack.c.l.b16 %v49
    %v139 = vunpack.c.l.b16 %v50
    %v140 = vunpack.c.l.b16 %v51
    %v141 = vunpack.c.l.b16 %v52
    %v142 = vunpack.c.l.b16 %v53
    %v143 = vunpack.c.l.b16 %v54
    %v144 = vunpack.c.l.b16 %v55
    %v145 = vunpack.c.l.b16 %v56
    %v146 = vunpack.c.l.b16 %v57
    %v147 = vunpack.c.l.b16 %v58
    %v148 = vunpack.c.l.b16 %v59
    %v149 = vpack.c.b16 %v114, %v113
    %v150 = vpack.c.b16 %v116, %v115
    %v151 = vpack.c.b16 %v118, %v117
    %v152 = vpack.c.b16 %v120, %v119
    %v153 = vpack.c.b16 %v122, %v121
    %v154 = vpack.c.b16 %v124, %v123
    %v155 = vpack.c.b16 %v126, %v125
    %v156 = vpack.c.b16 %v128, %v127
    %v157 = vpack.c.b16 %v130, %v129
    %v158 = vpack.c.b16 %v132, %v131
    %v159 = vpack.c.b16 %v134, %v133
    %v160 = vpack.c.b16 %v136, %v135
    %v161 = vpack.c.b16 %v138, %v137
    %v162 = vpack.c.b16 %v140, %v139
    %v163 = vpack.c.b16 %v142, %v141
    %v164 = vpack.c.b16 %v144, %v143
    %v165 = vpack.c.b16 %v146, %v145
    %v166 = vpack.c.b16 %v148, %v147
    %vm185 = vcmask 261120
    %v187 = vsel %vm185, %v74, 0
    %189 = vmatprep.subr.bf16.mxu0 0
    %190 = vmatpush1.bf16.msra.mxu0 %v149
    %191 = vmatprep.subr.bf16.mxu0 0
    %192 = vmatpush1.bf16.msra.mxu0 %v150
    %193 = vmatprep.subr.bf16.mxu0 0
    %194 = vmatpush1.bf16.msra.mxu0 %v151
    %195 = vmatprep.subr.bf16.mxu0 0
    %196 = vmatpush1.bf16.msra.mxu0 %v152
    %197 = vmatprep.subr.bf16.mxu0 0
    %198 = vmatpush1.bf16.msra.mxu0 %v153
    %199 = vmatprep.subr.bf16.mxu0 0
    %200 = vmatpush1.bf16.msra.mxu0 %v154
    %201 = vmatprep.subr.bf16.mxu0 0
    %202 = vmatpush1.bf16.msra.mxu0 %v155
    %203 = vmatprep.subr.bf16.mxu0 0
    %204 = vmatpush1.bf16.msra.mxu0 %v156
    %205 = vmatprep.subr.bf16.mxu0 0
    %206 = vmatpush1.bf16.msra.mxu0 %v157
    %207 = vmatprep.subr.bf16.mxu0 0
    %208 = vmatpush1.bf16.msra.mxu0 %v158
    %209 = vmatprep.subr.bf16.mxu0 0
    %210 = vmatpush1.bf16.msra.mxu0 %v159
    %211 = vmatprep.subr.bf16.mxu0 0
    %212 = vmatpush1.bf16.msra.mxu0 %v160
    %213 = vmatprep.subr.bf16.mxu0 0
    %214 = vmatpush1.bf16.msra.mxu0 %v161
    %215 = vmatprep.subr.bf16.mxu0 0
    %216 = vmatpush1.bf16.msra.mxu0 %v162
    %217 = vmatprep.subr.bf16.mxu0 0
    %218 = vmatpush1.bf16.msra.mxu0 %v163
    %219 = vmatprep.subr.bf16.mxu0 0
    %220 = vmatpush1.bf16.msra.mxu0 %v164
    %221 = vmatprep.mubr.bf16.mxu0 %v73
    %222 = vmatmul.mubr.bf16.gmra.mrb[0].mxu0 %v72
    %v223 = vpop.f32.mrb[0].mxu0
    %v224 = vadd.f32 %v65, %v223
    %v225 = vpop.f32.mrb[0].mxu0
    %v226 = vpop.f32.mrb[0].mxu0
    %v227 = vpop.f32.mrb[0].mxu0
    %228 = vdwg.mxu0
    %229 = vmatprep.subr.bf16.mxu0 0
    %230 = vmatpush1.bf16.msra.mxu0 %v165
    %231 = vmatprep.subr.bf16.mxu0 0
    %232 = vmatpush1.bf16.msra.mxu0 %v166
    %233 = vmatprep.subr.bf16.mxu0 0
    %234 = vmatpush1.bf16.msra.mxu0 0
    %235 = vmatprep.subr.bf16.mxu0 0
    %236 = vmatpush1.bf16.msra.mxu0 0
    %237 = vmatprep.subr.bf16.mxu0 0
    %238 = vmatpush1.bf16.msra.mxu0 0
    %239 = vmatprep.subr.bf16.mxu0 0
    %240 = vmatpush1.bf16.msra.mxu0 0
    %241 = vmatprep.subr.bf16.mxu0 0
    %242 = vmatpush1.bf16.msra.mxu0 0
    %243 = vmatprep.subr.bf16.mxu0 0
    %244 = vmatpush1.bf16.msra.mxu0 0
    %245 = vmatprep.subr.bf16.mxu0 0
    %246 = vmatpush1.bf16.msra.mxu0 0
    %247 = vmatprep.subr.bf16.mxu0 0
    %248 = vmatpush1.bf16.msra.mxu0 0
    %249 = vmatprep.subr.bf16.mxu0 0
    %250 = vmatpush1.bf16.msra.mxu0 0
    %251 = vmatprep.subr.bf16.mxu0 0
    %252 = vmatpush1.bf16.msra.mxu0 0
    %253 = vmatprep.subr.bf16.mxu0 0
    %254 = vmatpush1.bf16.msra.mxu0 0
    %255 = vmatprep.subr.bf16.mxu0 0
    %256 = vmatpush1.bf16.msra.mxu0 0
    %257 = vmatprep.subr.bf16.mxu0 0
    %258 = vmatpush1.bf16.msra.mxu0 0
    %259 = vmatprep.subr.bf16.mxu0 0
    %260 = vmatpush1.bf16.msra.mxu0 0
    %261 = vmatprep.mubr.bf16.mxu0 0
    %262 = vmatmul.mubr.bf16.gmra.mrb[0].mxu0 %v187
    %v263 = vpop.f32.mrb[0].mxu0
    %v264 = vadd.f32 %v224, %v263
    %v265 = vpop.f32.mrb[0].mxu0
    %v266 = vpop.f32.mrb[0].mxu0
    %v267 = vpop.f32.mrb[0].mxu0
    %268 = vdwg.mxu0
    %v269 = vmax.f32 %v264, 0.0
    %v270 = vpack.c.bf16 %v269, %v269
    %v271 = vld [vmem:[%s3] sm:$0xf]
    %v272 = vld [vmem:[%s3 + $0x4] sm:$0xf]
    %v273 = vld [vmem:[%s3 + $0x8] sm:$0xf]
    %v274 = vld [vmem:[%s3 + $0xc] sm:$0xf]
    %v275 = vld [vmem:[%s3 + $0x10] sm:$0xf]
    %v276 = vld [vmem:[%s3 + $0x14] sm:$0xf]
    %v277 = vld [vmem:[%s3 + $0x18] sm:$0xf]
    %v278 = vld [vmem:[%s3 + $0x1c] sm:$0xf]
    %v279 = vld [vmem:[%s4] sm:$0x1]
    %v281 = vlaneseq
    %v282 = vshrl.u32 %v281, 7
    %v283 = vsub.s32 0, %v282
    %v284 = vrot.slane %v279, %v283
    %v294 = vunpack.c.l.b16 %v271
    %v295 = vunpack.c.l.b16 %v272
    %v296 = vunpack.c.l.b16 %v273
    %v297 = vunpack.c.l.b16 %v274
    %v298 = vunpack.c.l.b16 %v275
    %v299 = vunpack.c.l.b16 %v276
    %v300 = vunpack.c.l.b16 %v277
    %v301 = vunpack.c.l.b16 %v278
    %v302 = vpack.c.b16 %v295, %v294
    %v303 = vpack.c.b16 %v297, %v296
    %v304 = vpack.c.b16 %v299, %v298
    %v305 = vpack.c.b16 %v301, %v300
    %vm310 = vcmask 523264
    %v312 = vsel %vm310, %v270, 0
    %314 = vmatprep.subr.bf16.mxu0 0
    %315 = vmatpush1.bf16.msra.mxu0 %v302
    %316 = vmatprep.subr.bf16.mxu0 0
    %317 = vmatpush1.bf16.msra.mxu0 %v303
    %318 = vmatprep.subr.bf16.mxu0 0
    %319 = vmatpush1.bf16.msra.mxu0 %v304
    %320 = vmatprep.subr.bf16.mxu0 0
    %321 = vmatpush1.bf16.msra.mxu0 %v305
    %322 = vmatprep.subr.bf16.mxu0 0
    %323 = vmatpush1.bf16.msra.mxu0 0
    %324 = vmatprep.subr.bf16.mxu0 0
    %325 = vmatpush1.bf16.msra.mxu0 0
    %326 = vmatprep.subr.bf16.mxu0 0
    %327 = vmatpush1.bf16.msra.mxu0 0
    %328 = vmatprep.subr.bf16.mxu0 0
    %329 = vmatpush1.bf16.msra.mxu0 0
    %330 = vmatprep.subr.bf16.mxu0 0
    %331 = vmatpush1.bf16.msra.mxu0 0
    %332 = vmatprep.subr.bf16.mxu0 0
    %333 = vmatpush1.bf16.msra.mxu0 0
    %334 = vmatprep.subr.bf16.mxu0 0
    %335 = vmatpush1.bf16.msra.mxu0 0
    %336 = vmatprep.subr.bf16.mxu0 0
    %337 = vmatpush1.bf16.msra.mxu0 0
    %338 = vmatprep.subr.bf16.mxu0 0
    %339 = vmatpush1.bf16.msra.mxu0 0
    %340 = vmatprep.subr.bf16.mxu0 0
    %341 = vmatpush1.bf16.msra.mxu0 0
    %342 = vmatprep.subr.bf16.mxu0 0
    %343 = vmatpush1.bf16.msra.mxu0 0
    %344 = vmatprep.subr.bf16.mxu0 0
    %345 = vmatpush1.bf16.msra.mxu0 0
    %346 = vmatprep.mubr.bf16.mxu0 0
    %347 = vmatmul.mubr.bf16.gmra.mrb[0].mxu0 %v312
    %v348 = vpop.f32.mrb[0].mxu0
    %v349 = vadd.f32 %v284, %v348
    %v350 = vpop.f32.mrb[0].mxu0
    %v351 = vpop.f32.mrb[0].mxu0
    %v352 = vpop.f32.mrb[0].mxu0
    %353 = vdwg.mxu0
    %v354 = vpack.c.bf16 %v349, %v349
    %vm355 = vcmask 519168
    %356 = vst.msk [vmem:[#allocation2] sm:$0xf] %vm355, %v354
    // Predicated region
    $region22: #{conv_stem_forward.7} parent=1 // pred_check
      _
    $region23: #{conv_stem_forward.7} parent=1 // pred_check_branch
      %358 = sbr.rel (0) target = $region25
    $region24: #{conv_stem_forward.7} parent=1 // pred_region
      %s360 = ssub.s32 64, 64
      %361 = vsyncadd [#allocation3], %s360
      %s363 = sshll.u32 [#allocation2], 4
      %s364 = int_to_ptr.vmem [resolvable:$true] %s363
      %366 = dma.vmem_to_hbm [thread:$0]  %s364, 64, %s5, [#allocation3]
    $region25: #{conv_stem_forward.7} parent=1 // pred_fallthru
      _
    // Predicated region
    $region26: #{conv_stem_forward.7} parent=1 // pred_check
      _
    $region27: #{conv_stem_forward.7} parent=1 // pred_check_branch
      %368 = sbr.rel (0) target = $region29
    $region28: #{conv_stem_forward.7} parent=1 // pred_region
      %369 = dma.done [#allocation3], 64
    $region29: #{conv_stem_forward.7} parent=1 // pred_fallthru
      _
    %370 = vsyncpa [#allocation3], 1

</llo_original>
